<compile_context>
chip_gen: v6e
topology: v6e:2x2x1
jax: 0.10.0
libtpu: 0.0.40
codegen_flags: <defaults>
</compile_context>

<pallas_src>
import functools

import jax
import jax.numpy as jnp
from jax import lax
from jax.experimental import pallas as pl
from jax.experimental.pallas import tpu as pltpu


CPAD = 128                     # conv output channels as stored (lane-dense stores)
APAD = 128                     # padded fc2 output width (lane-dense final store)
COMPUTE_DTYPE = jnp.bfloat16   # MXU operand dtype (f32 accumulate)


def _round_up(x, m):
    return (x + m - 1) // m * m


def _vmem_limit_bytes():
    """Generation-aware VMEM budget: ~3/4 of physical, capped at 96 MiB."""
    try:
        info = pltpu.get_tpu_info()
        cap = getattr(info, "vmem_capacity_bytes", None)
        if cap:
            return int(min(cap * 3 // 4, 96 * 1024 * 1024))
    except Exception:
        pass
    return 32 * 1024 * 1024     # conservative fallback (fits every generation)


_COMPILER_PARAMS = pltpu.CompilerParams(
    dimension_semantics=("parallel",),          # M-tiles independent -> both TCs on v7x
    vmem_limit_bytes=_vmem_limit_bytes(),
)


# ----------------------------------------------------------------------------
# Pallas kernels
# ----------------------------------------------------------------------------
def _matmul_bias_act_kernel(x_ref, w_ref, b_ref, o_ref, *, relu):
    """o = relu?(x @ w + b): bf16 operands, f32 MXU accumulate, f32 epilogue."""
    acc = jnp.dot(x_ref[...], w_ref[...], preferred_element_type=jnp.float32)
    acc = acc + b_ref[...]                 # (TM, N) + (1, N), f32
    if relu:
        acc = jnp.maximum(acc, 0.0)
    o_ref[...] = acc.astype(o_ref.dtype)


def _fc_fused_kernel(x_ref, w1_ref, b1_ref, w2_ref, b2_ref, o_ref):
    """o = relu(x @ w1 + b1) @ w2 + b2; the 512-wide hidden never leaves VMEM."""
    h = jnp.dot(x_ref[...], w1_ref[...], preferred_element_type=jnp.float32)
    h = jnp.maximum(h + b1_ref[...], 0.0)
    q = jnp.dot(h.astype(w2_ref.dtype), w2_ref[...],
                preferred_element_type=jnp.float32)
    o_ref[...] = (q + b2_ref[...]).astype(o_ref.dtype)


# ----------------------------------------------------------------------------
# Matmul wrappers (row-tiled, ragged last block -> no HBM row padding)
# ----------------------------------------------------------------------------
def _pick_tm(m, block_m):
    """Row-tile size: <= block_m, multiple of 8, and >=2 grid steps when M allows
    (so v7x's two TensorCores both get work via dimension_semantics=parallel)."""
    if m <= 8:
        return m                                    # full-dim block (always legal)
    tm = min(block_m, _round_up(pl.cdiv(m, 2), 8))
    return min(tm, m)


def pallas_matmul_bias(x, w, b, *, relu, out_dtype, block_m=1024):
    """x: (M, K) bf16, w: (K, N) bf16, b: (1, N) f32 -> (M, N) out_dtype."""
    m, k = x.shape
    n = w.shape[1]
    tm = _pick_tm(m, block_m)
    return pl.pallas_call(
        functools.partial(_matmul_bias_act_kernel, relu=relu),
        out_shape=jax.ShapeDtypeStruct((m, n), out_dtype),
        grid_spec=pltpu.PrefetchScalarGridSpec(
            num_scalar_prefetch=0,
            grid=(pl.cdiv(m, tm),),
            in_specs=[
                pl.BlockSpec((tm, k), lambda i: (i, 0)),   # streamed, double-buffered
                pl.BlockSpec((k, n), lambda i: (0, 0)),    # weights resident in VMEM
                pl.BlockSpec((1, n), lambda i: (0, 0)),
            ],
            out_specs=pl.BlockSpec((tm, n), lambda i: (i, 0)),
        ),
        compiler_params=_COMPILER_PARAMS,
    )(x, w, b)


def pallas_fc_fused(x, w1, b1, w2, b2, *, block_m=256):
    """relu(x @ w1 + b1) @ w2 + b2 (fused). x: (M, K1) bf16 -> (M, N2) f32."""
    m, k1 = x.shape
    n1, n2 = w1.shape[1], w2.shape[1]
    tm = _pick_tm(m, block_m)
    return pl.pallas_call(
        _fc_fused_kernel,
        out_shape=jax.ShapeDtypeStruct((m, n2), jnp.float32),
        grid_spec=pltpu.PrefetchScalarGridSpec(
            num_scalar_prefetch=0,
            grid=(pl.cdiv(m, tm),),
            in_specs=[
                pl.BlockSpec((tm, k1), lambda i: (i, 0)),
                pl.BlockSpec((k1, n1), lambda i: (0, 0)),
                pl.BlockSpec((1, n1), lambda i: (0, 0)),
                pl.BlockSpec((n1, n2), lambda i: (0, 0)),
                pl.BlockSpec((1, n2), lambda i: (0, 0)),
            ],
            out_specs=pl.BlockSpec((tm, n2), lambda i: (i, 0)),
        ),
        compiler_params=_COMPILER_PARAMS,
    )(x, w1, b1, w2, b2)


# ----------------------------------------------------------------------------
# Conv2d = NHWC im2col (lane-contiguous glue, real channels only) + Pallas matmul
# ----------------------------------------------------------------------------
def _pad_last_dim(x, k_pad):
    k = x.shape[-1]
    if k_pad == k:
        return x
    return jnp.pad(x, [(0, 0)] * (x.ndim - 1) + [(0, k_pad - k)])


def _im2col_nhwc(x, kh, kw, stride):
    """x: (N, H, W, C) -> (N*oh*ow, kh*kw*C); column order = (kh, kw, C)."""
    n, h, w, c = x.shape
    oh = (h - kh) // stride + 1
    ow = (w - kw) // stride + 1
    taps = []
    for i in range(kh):
        for j in range(kw):
            taps.append(x[:, i:i + stride * oh:stride, j:j + stride * ow:stride, :])
    patches = jnp.concatenate(taps, axis=-1)        # lane-contiguous, no transpose
    return patches.reshape(n * oh * ow, kh * kw * c), oh, ow


def conv2d_relu(x_nhwc, c_in_real, w_mat, b_row, kernel, stride):
    """x: (N,H,W,>=Cin) bf16; w_mat: (Kpad, CPAD) bf16; b: (1, CPAD) f32."""
    n = x_nhwc.shape[0]
    if x_nhwc.shape[-1] != c_in_real:
        x_nhwc = x_nhwc[..., :c_in_real]            # drop the lane-padding channels
    patches, oh, ow = _im2col_nhwc(x_nhwc, kernel, kernel, stride)
    patches = _pad_last_dim(patches, w_mat.shape[0])    # K -> next multiple of 128
    out = pallas_matmul_bias(patches, w_mat, b_row, relu=True,
                             out_dtype=COMPUTE_DTYPE)
    return out.reshape(n, oh, ow, w_mat.shape[1])


# ----------------------------------------------------------------------------
# Parameters: PyTorch-layout init + one-time conversion to kernel layout
# ----------------------------------------------------------------------------
def init_params(key, input_shape, num_actions):
    """PyTorch-default-style init, torch layouts (OIHW conv, (in, out) fc)."""
    c_in, h, w = input_shape
    ks = jax.random.split(key, 10)

    def u(k, shape, fan_in):
        bound = 1.0 / jnp.sqrt(fan_in)
        return jax.random.uniform(k, shape, jnp.float32, -bound, bound)

    p = {}
    p["w1"] = u(ks[0], (32, c_in, 8, 8), c_in * 64); p["b1"] = u(ks[1], (32,), c_in * 64)
    p["w2"] = u(ks[2], (64, 32, 4, 4), 32 * 16);     p["b2"] = u(ks[3], (64,), 32 * 16)
    p["w3"] = u(ks[4], (64, 64, 3, 3), 64 * 9);      p["b3"] = u(ks[5], (64,), 64 * 9)

    h1, w1 = (h - 8) // 4 + 1, (w - 8) // 4 + 1
    h2, w2 = (h1 - 4) // 2 + 1, (w1 - 4) // 2 + 1
    h3, w3 = (h2 - 3) // 1 + 1, (w2 - 3) // 1 + 1
    feat = 64 * h3 * w3
    p["fw1"] = u(ks[6], (feat, 512), feat);          p["fb1"] = u(ks[7], (512,), feat)
    p["fw2"] = u(ks[8], (512, num_actions), 512);    p["fb2"] = u(ks[9], (512,) and (num_actions,), 512)
    return p


def prepare_params(p, input_shape, num_actions):
    """One-time conversion of torch-layout params to kernel layout:
       conv weights -> (round128(kh*kw*C_real), CPAD) bf16 (real in-channels,
       zero-padded K tail and out-channel tail), fc1 rows permuted from torch
       (C,H,W) flatten order to (H,W,C) and zero-padded to a 128-multiple K,
       fc2 outputs zero-padded to APAD, biases -> (1, N) f32 rows."""
    c_in, h, w = input_shape
    h1, w1 = (h - 8) // 4 + 1, (w - 8) // 4 + 1
    h2, w2 = (h1 - 4) // 2 + 1, (w1 - 4) // 2 + 1
    h3, w3 = (h2 - 3) // 1 + 1, (w2 - 3) // 1 + 1
    assert num_actions <= APAD, f"num_actions={num_actions} must be <= APAD={APAD}"

    def conv_w(wt):
        o, c, kh, kw = wt.shape
        k_real = kh * kw * c
        wm = wt.transpose(2, 3, 1, 0).reshape(k_real, o)        # rows: (kh, kw, c)
        wm = jnp.pad(wm, ((0, _round_up(k_real, 128) - k_real), (0, CPAD - o)))
        return wm.astype(COMPUTE_DTYPE)

    def bias_row(b, n_pad):
        return jnp.pad(b, (0, n_pad - b.shape[0])).reshape(1, -1).astype(jnp.float32)

    kp = {}
    kp["w1"] = conv_w(p["w1"]); kp["b1"] = bias_row(p["b1"], CPAD)
    kp["w2"] = conv_w(p["w2"]); kp["b2"] = bias_row(p["b2"], CPAD)
    kp["w3"] = conv_w(p["w3"]); kp["b3"] = bias_row(p["b3"], CPAD)

    feat = 64 * h3 * w3
    feat_pad = _round_up(feat, 128)
    fw1 = p["fw1"].reshape(64, h3, w3, 512).transpose(1, 2, 0, 3)   # (h3,w3,C,512)
    fw1 = fw1.reshape(feat, 512)
    kp["fw1"] = jnp.pad(fw1, ((0, feat_pad - feat), (0, 0))).astype(COMPUTE_DTYPE)
    kp["fb1"] = p["fb1"].reshape(1, -1).astype(jnp.float32)

    kp["fw2"] = jnp.pad(p["fw2"], ((0, 0), (0, APAD - num_actions))
                        ).astype(COMPUTE_DTYPE)
    kp["fb2"] = bias_row(p["fb2"], APAD)
    return kp


# ----------------------------------------------------------------------------
# Forward
# ----------------------------------------------------------------------------
def cnn_dqn_forward(kp, x, *, num_actions):
    """x: (N, C, H, W) f32 -> (N, num_actions) f32."""
    n, c_in = x.shape[0], x.shape[1]
    h = x.transpose(0, 2, 3, 1).astype(COMPUTE_DTYPE)    # single NCHW->NHWC transpose
    h = conv2d_relu(h, c_in, kp["w1"], kp["b1"], kernel=8, stride=4)
    h = conv2d_relu(h, 32, kp["w2"], kp["b2"], kernel=4, stride=2)
    h = conv2d_relu(h, 64, kp["w3"], kp["b3"], kernel=3, stride=1)
    h = h[..., :64].reshape(n, -1)                        # (n, h3*w3*64) = fw1 row order
    h = _pad_last_dim(h, kp["fw1"].shape[0])              # K -> multiple of 128
    q = pallas_fc_fused(h, kp["fw1"], kp["fb1"], kp["fw2"], kp["fb2"])
    return q[:, :num_actions]


# ----------------------------------------------------------------------------
# References (pure JAX) for correctness checks
# ----------------------------------------------------------------------------
def _ref_forward_f32(p, x):
    def conv(h, w, b, s):
        y = lax.conv_general_dilated(
            h, w, window_strides=(s, s), padding="VALID",
            dimension_numbers=("NCHW", "OIHW", "NCHW"),
            precision=lax.Precision.HIGHEST)
        return jnp.maximum(y + b.reshape(1, -1, 1, 1), 0.0)
    h = conv(x, p["w1"], p["b1"], 4)
    h = conv(h, p["w2"], p["b2"], 2)
    h = conv(h, p["w3"], p["b3"], 1)
    h = h.reshape(x.shape[0], -1)
    h = jnp.maximum(h @ p["fw1"] + p["fb1"], 0.0)
    return h @ p["fw2"] + p["fb2"]


def _ref_forward_bf16(p, x):
    """Precision-matched reference: bf16 operands, f32 accumulate/epilogue."""
    bf = jnp.bfloat16

    def conv(h, w, b, s):
        y = lax.conv_general_dilated(
            h.astype(bf), w.astype(bf), window_strides=(s, s), padding="VALID",
            dimension_numbers=("NCHW", "OIHW", "NCHW"),
            preferred_element_type=jnp.float32)
        return jnp.maximum(y + b.reshape(1, -1, 1, 1), 0.0).astype(bf)

    h = conv(x, p["w1"], p["b1"], 4)
    h = conv(h, p["w2"], p["b2"], 2)
    h = conv(h, p["w3"], p["b3"], 1)
    h = h.reshape(x.shape[0], -1)
    h1 = jnp.maximum(
        jnp.dot(h.astype(bf), p["fw1"].astype(bf),
                preferred_element_type=jnp.float32) + p["fb1"], 0.0)
    return jnp.dot(h1.astype(bf), p["fw2"].astype(bf),
                   preferred_element_type=jnp.float32) + p["fb2"]


if __name__ == "__main__":
    # Smallest conv-stack-valid shapes: (36-8)/4+1=8 -> (8-4)/2+1=3 -> (3-3)+1=1.
    batch, c_in, hw, num_actions = 2, 4, 36, 6
    input_shape = (c_in, hw, hw)

    key = jax.random.PRNGKey(0)
    k_p, k_x = jax.random.split(key)
    params = init_params(k_p, input_shape, num_actions)
    kparams = prepare_params(params, input_shape, num_actions)
    x = jax.random.normal(k_x, (batch, c_in, hw, hw), jnp.float32)

    fwd = jax.jit(functools.partial(cnn_dqn_forward, num_actions=num_actions))
    q = jax.block_until_ready(fwd(kparams, x))
    assert q.shape == (batch, num_actions)

    # Tight check vs a precision-matched (bf16 operands / f32 accumulate) reference.
    q_bf = _ref_forward_bf16(params, x)
    assert jnp.allclose(q, q_bf, atol=1e-2, rtol=1e-2), "mismatch vs bf16 reference"

    # Loose sanity check vs the full-f32 PyTorch-equivalent reference.
    q_f32 = _ref_forward_f32(params, x)
    assert jnp.allclose(q, q_f32, atol=1e-1, rtol=1e-1), "mismatch vs f32 reference"

    print("KERNEL_OK")
</pallas_src>

<mosaic_0001>
module attributes {stable_mosaic.version = 11 : i64} {
  func.func @_matmul_bias_act_kernel(%arg0: i32, %arg1: memref<64x256xbf16, #tpu.memory_space<vmem>>, %arg2: memref<256x128xbf16, #tpu.memory_space<vmem>>, %arg3: memref<1x128xf32, #tpu.memory_space<vmem>>, %arg4: memref<64x128xbf16, #tpu.memory_space<vmem>>) attributes {dimension_semantics = [#tpu.dimension_semantics<parallel>], iteration_bounds = array<i64: 2>, scalar_prefetch = 0 : i64, scratch_operands = 0 : i64, tpu.core_type = #tpu.core_type<tc>, window_params = [{transform_indices = @transform_0, window_bounds = array<i64: 64, 256>}, {pipeline_mode = #tpu.pipeline_mode<synchronous>, transform_indices = @transform_1, window_bounds = array<i64: 256, 128>}, {pipeline_mode = #tpu.pipeline_mode<synchronous>, transform_indices = @transform_2, window_bounds = array<i64: 1, 128>}, {transform_indices = @transform_3, window_bounds = array<i64: 64, 128>}]} {
    %c0 = arith.constant 0 : index
    %c0_0 = arith.constant 0 : index
    %0 = vector.load %arg1[%c0, %c0_0] : memref<64x256xbf16, #tpu.memory_space<vmem>>, vector<64x256xbf16>
    %c0_1 = arith.constant 0 : index
    %c0_2 = arith.constant 0 : index
    %1 = vector.load %arg2[%c0_1, %c0_2] : memref<256x128xbf16, #tpu.memory_space<vmem>>, vector<256x128xbf16>
    %cst = arith.constant dense<0.000000e+00> : vector<64x128xf32>
    %2 = tpu.matmul %0, %1, %cst {dimension_numbers = #tpu.dot_dimension_numbers<[1], [0], [0], [1], [0, 0, 1, 1], [], []>} : vector<64x256xbf16>, vector<256x128xbf16>, vector<64x128xf32> -> vector<64x128xf32>
    %c0_3 = arith.constant 0 : index
    %c0_4 = arith.constant 0 : index
    %3 = vector.load %arg3[%c0_3, %c0_4] : memref<1x128xf32, #tpu.memory_space<vmem>>, vector<1x128xf32>
    %4 = vector.broadcast %3 : vector<1x128xf32> to vector<64x128xf32>
    %5 = arith.addf %2, %4 : vector<64x128xf32>
    %cst_5 = arith.constant 0.000000e+00 : f32
    %6 = vector.broadcast %cst_5 : f32 to vector<64x128xf32>
    %7 = arith.maximumf %5, %6 : vector<64x128xf32>
    %8 = arith.truncf %7 : vector<64x128xf32> to vector<64x128xbf16>
    %c0_6 = arith.constant 0 : index
    %c0_7 = arith.constant 0 : index
    %9 = vector.load %arg4[%c0_6, %c0_7] : memref<64x128xbf16, #tpu.memory_space<vmem>>, vector<64x128xbf16>
    tpu.vector_store %arg4[%c0_6, %c0_7], %8 {strides = array<i32>} : memref<64x128xbf16, #tpu.memory_space<vmem>>, vector<64x128xbf16>,
    return
  }
  func.func @transform_0(%arg0: i32) -> (i32, i32) {
    %c0_i32 = arith.constant 0 : i32
    %c0_i32_0 = arith.constant 0 : i32
    return %arg0, %c0_i32 : i32, i32
  }
  func.func @transform_1(%arg0: i32) -> (i32, i32) {
    %c0_i32 = arith.constant 0 : i32
    %c0_i32_0 = arith.constant 0 : i32
    %c0_i32_1 = arith.constant 0 : i32
    return %c0_i32, %c0_i32_0 : i32, i32
  }
  func.func @transform_2(%arg0: i32) -> (i32, i32) {
    %c0_i32 = arith.constant 0 : i32
    %c0_i32_0 = arith.constant 0 : i32
    %c0_i32_1 = arith.constant 0 : i32
    return %c0_i32, %c0_i32_0 : i32, i32
  }
  func.func @transform_3(%arg0: i32) -> (i32, i32) {
    %c0_i32 = arith.constant 0 : i32
    %c0_i32_0 = arith.constant 0 : i32
    return %arg0, %c0_i32 : i32, i32
  }
}

module attributes {stable_mosaic.version = 11 : i64} {
  func.func @_matmul_bias_act_kernel(%arg0: i32, %arg1: memref<16x512xbf16, #tpu.memory_space<vmem>>, %arg2: memref<512x128xbf16, #tpu.memory_space<vmem>>, %arg3: memref<1x128xf32, #tpu.memory_space<vmem>>, %arg4: memref<16x128xbf16, #tpu.memory_space<vmem>>) attributes {dimension_semantics = [#tpu.dimension_semantics<parallel>], iteration_bounds = array<i64: 2>, scalar_prefetch = 0 : i64, scratch_operands = 0 : i64, tpu.core_type = #tpu.core_type<tc>, window_params = [{transform_indices = @transform_0, window_bounds = array<i64: 16, 512>}, {pipeline_mode = #tpu.pipeline_mode<synchronous>, transform_indices = @transform_1, window_bounds = array<i64: 512, 128>}, {pipeline_mode = #tpu.pipeline_mode<synchronous>, transform_indices = @transform_2, window_bounds = array<i64: 1, 128>}, {transform_indices = @transform_3, window_bounds = array<i64: 16, 128>}]} {
    %c0 = arith.constant 0 : index
    %c0_0 = arith.constant 0 : index
    %0 = vector.load %arg1[%c0, %c0_0] : memref<16x512xbf16, #tpu.memory_space<vmem>>, vector<16x512xbf16>
    %c0_1 = arith.constant 0 : index
    %c0_2 = arith.constant 0 : index
    %1 = vector.load %arg2[%c0_1, %c0_2] : memref<512x128xbf16, #tpu.memory_space<vmem>>, vector<512x128xbf16>
    %cst = arith.constant dense<0.000000e+00> : vector<16x128xf32>
    %2 = tpu.matmul %0, %1, %cst {dimension_numbers = #tpu.dot_dimension_numbers<[1], [0], [0], [1], [0, 0, 1, 1], [], []>} : vector<16x512xbf16>, vector<512x128xbf16>, vector<16x128xf32> -> vector<16x128xf32>
    %c0_3 = arith.constant 0 : index
    %c0_4 = arith.constant 0 : index
    %3 = vector.load %arg3[%c0_3, %c0_4] : memref<1x128xf32, #tpu.memory_space<vmem>>, vector<1x128xf32>
    %4 = vector.broadcast %3 : vector<1x128xf32> to vector<16x128xf32>
    %5 = arith.addf %2, %4 : vector<16x128xf32>
    %cst_5 = arith.constant 0.000000e+00 : f32
    %6 = vector.broadcast %cst_5 : f32 to vector<16x128xf32>
    %7 = arith.maximumf %5, %6 : vector<16x128xf32>
    %8 = arith.truncf %7 : vector<16x128xf32> to vector<16x128xbf16>
    %c0_6 = arith.constant 0 : index
    %c0_7 = arith.constant 0 : index
    %9 = vector.load %arg4[%c0_6, %c0_7] : memref<16x128xbf16, #tpu.memory_space<vmem>>, vector<16x128xbf16>
    tpu.vector_store %arg4[%c0_6, %c0_7], %8 {strides = array<i32>} : memref<16x128xbf16, #tpu.memory_space<vmem>>, vector<16x128xbf16>,
    return
  }
  func.func @transform_0(%arg0: i32) -> (i32, i32) {
    %c0_i32 = arith.constant 0 : i32
    %c0_i32_0 = arith.constant 0 : i32
    return %arg0, %c0_i32 : i32, i32
  }
  func.func @transform_1(%arg0: i32) -> (i32, i32) {
    %c0_i32 = arith.constant 0 : i32
    %c0_i32_0 = arith.constant 0 : i32
    %c0_i32_1 = arith.constant 0 : i32
    return %c0_i32, %c0_i32_0 : i32, i32
  }
  func.func @transform_2(%arg0: i32) -> (i32, i32) {
    %c0_i32 = arith.constant 0 : i32
    %c0_i32_0 = arith.constant 0 : i32
    %c0_i32_1 = arith.constant 0 : i32
    return %c0_i32, %c0_i32_0 : i32, i32
  }
  func.func @transform_3(%arg0: i32) -> (i32, i32) {
    %c0_i32 = arith.constant 0 : i32
    %c0_i32_0 = arith.constant 0 : i32
    return %arg0, %c0_i32 : i32, i32
  }
}

module attributes {stable_mosaic.version = 11 : i64} {
  func.func @_matmul_bias_act_kernel(%arg0: i32, %arg1: memref<2x640xbf16, #tpu.memory_space<vmem>>, %arg2: memref<640x128xbf16, #tpu.memory_space<vmem>>, %arg3: memref<1x128xf32, #tpu.memory_space<vmem>>, %arg4: memref<2x128xbf16, #tpu.memory_space<vmem>>) attributes {dimension_semantics = [#tpu.dimension_semantics<parallel>], iteration_bounds = array<i64: 1>, scalar_prefetch = 0 : i64, scratch_operands = 0 : i64, tpu.core_type = #tpu.core_type<tc>, window_params = [{transform_indices = @transform_0, window_bounds = array<i64: 2, 640>}, {pipeline_mode = #tpu.pipeline_mode<synchronous>, transform_indices = @transform_1, window_bounds = array<i64: 640, 128>}, {pipeline_mode = #tpu.pipeline_mode<synchronous>, transform_indices = @transform_2, window_bounds = array<i64: 1, 128>}, {transform_indices = @transform_3, window_bounds = array<i64: 2, 128>}]} {
    %c0 = arith.constant 0 : index
    %c0_0 = arith.constant 0 : index
    %0 = vector.load %arg1[%c0, %c0_0] : memref<2x640xbf16, #tpu.memory_space<vmem>>, vector<2x640xbf16>
    %c0_1 = arith.constant 0 : index
    %c0_2 = arith.constant 0 : index
    %1 = vector.load %arg2[%c0_1, %c0_2] : memref<640x128xbf16, #tpu.memory_space<vmem>>, vector<640x128xbf16>
    %cst = arith.constant dense<0.000000e+00> : vector<2x128xf32>
    %2 = tpu.matmul %0, %1, %cst {dimension_numbers = #tpu.dot_dimension_numbers<[1], [0], [0], [1], [0, 0, 1, 1], [], []>} : vector<2x640xbf16>, vector<640x128xbf16>, vector<2x128xf32> -> vector<2x128xf32>
    %c0_3 = arith.constant 0 : index
    %c0_4 = arith.constant 0 : index
    %3 = vector.load %arg3[%c0_3, %c0_4] : memref<1x128xf32, #tpu.memory_space<vmem>>, vector<1x128xf32>
    %4 = vector.broadcast %3 : vector<1x128xf32> to vector<2x128xf32>
    %5 = arith.addf %2, %4 : vector<2x128xf32>
    %cst_5 = arith.constant 0.000000e+00 : f32
    %6 = vector.broadcast %cst_5 : f32 to vector<2x128xf32>
    %7 = arith.maximumf %5, %6 : vector<2x128xf32>
    %8 = arith.truncf %7 : vector<2x128xf32> to vector<2x128xbf16>
    %c0_6 = arith.constant 0 : index
    %c0_7 = arith.constant 0 : index
    %9 = vector.load %arg4[%c0_6, %c0_7] : memref<2x128xbf16, #tpu.memory_space<vmem>>, vector<2x128xbf16>
    tpu.vector_store %arg4[%c0_6, %c0_7], %8 {strides = array<i32>} : memref<2x128xbf16, #tpu.memory_space<vmem>>, vector<2x128xbf16>,
    return
  }
  func.func @transform_0(%arg0: i32) -> (i32, i32) {
    %c0_i32 = arith.constant 0 : i32
    %c0_i32_0 = arith.constant 0 : i32
    return %arg0, %c0_i32 : i32, i32
  }
  func.func @transform_1(%arg0: i32) -> (i32, i32) {
    %c0_i32 = arith.constant 0 : i32
    %c0_i32_0 = arith.constant 0 : i32
    %c0_i32_1 = arith.constant 0 : i32
    return %c0_i32, %c0_i32_0 : i32, i32
  }
  func.func @transform_2(%arg0: i32) -> (i32, i32) {
    %c0_i32 = arith.constant 0 : i32
    %c0_i32_0 = arith.constant 0 : i32
    %c0_i32_1 = arith.constant 0 : i32
    return %c0_i32, %c0_i32_0 : i32, i32
  }
  func.func @transform_3(%arg0: i32) -> (i32, i32) {
    %c0_i32 = arith.constant 0 : i32
    %c0_i32_0 = arith.constant 0 : i32
    return %arg0, %c0_i32 : i32, i32
  }
}

module attributes {stable_mosaic.version = 11 : i64} {
  func.func @_fc_fused_kernel(%arg0: i32, %arg1: memref<2x128xbf16, #tpu.memory_space<vmem>>, %arg2: memref<128x512xbf16, #tpu.memory_space<vmem>>, %arg3: memref<1x512xf32, #tpu.memory_space<vmem>>, %arg4: memref<512x128xbf16, #tpu.memory_space<vmem>>, %arg5: memref<1x128xf32, #tpu.memory_space<vmem>>, %arg6: memref<2x128xf32, #tpu.memory_space<vmem>>) attributes {dimension_semantics = [#tpu.dimension_semantics<parallel>], iteration_bounds = array<i64: 1>, scalar_prefetch = 0 : i64, scratch_operands = 0 : i64, tpu.core_type = #tpu.core_type<tc>, window_params = [{transform_indices = @transform_0, window_bounds = array<i64: 2, 128>}, {pipeline_mode = #tpu.pipeline_mode<synchronous>, transform_indices = @transform_1, window_bounds = array<i64: 128, 512>}, {pipeline_mode = #tpu.pipeline_mode<synchronous>, transform_indices = @transform_2, window_bounds = array<i64: 1, 512>}, {pipeline_mode = #tpu.pipeline_mode<synchronous>, transform_indices = @transform_3, window_bounds = array<i64: 512, 128>}, {pipeline_mode = #tpu.pipeline_mode<synchronous>, transform_indices = @transform_4, window_bounds = array<i64: 1, 128>}, {transform_indices = @transform_5, window_bounds = array<i64: 2, 128>}]} {
    %c0 = arith.constant 0 : index
    %c0_0 = arith.constant 0 : index
    %0 = vector.load %arg1[%c0, %c0_0] : memref<2x128xbf16, #tpu.memory_space<vmem>>, vector<2x128xbf16>
    %c0_1 = arith.constant 0 : index
    %c0_2 = arith.constant 0 : index
    %1 = vector.load %arg2[%c0_1, %c0_2] : memref<128x512xbf16, #tpu.memory_space<vmem>>, vector<128x512xbf16>
    %cst = arith.constant dense<0.000000e+00> : vector<2x512xf32>
    %2 = tpu.matmul %0, %1, %cst {dimension_numbers = #tpu.dot_dimension_numbers<[1], [0], [0], [1], [0, 0, 1, 1], [], []>} : vector<2x128xbf16>, vector<128x512xbf16>, vector<2x512xf32> -> vector<2x512xf32>
    %c0_3 = arith.constant 0 : index
    %c0_4 = arith.constant 0 : index
    %3 = vector.load %arg3[%c0_3, %c0_4] : memref<1x512xf32, #tpu.memory_space<vmem>>, vector<1x512xf32>
    %4 = vector.broadcast %3 : vector<1x512xf32> to vector<2x512xf32>
    %5 = arith.addf %2, %4 : vector<2x512xf32>
    %cst_5 = arith.constant 0.000000e+00 : f32
    %6 = vector.broadcast %cst_5 : f32 to vector<2x512xf32>
    %7 = arith.maximumf %5, %6 : vector<2x512xf32>
    %8 = arith.truncf %7 : vector<2x512xf32> to vector<2x512xbf16>
    %c0_6 = arith.constant 0 : index
    %c0_7 = arith.constant 0 : index
    %9 = vector.load %arg4[%c0_6, %c0_7] : memref<512x128xbf16, #tpu.memory_space<vmem>>, vector<512x128xbf16>
    %cst_8 = arith.constant dense<0.000000e+00> : vector<2x128xf32>
    %10 = tpu.matmul %8, %9, %cst_8 {dimension_numbers = #tpu.dot_dimension_numbers<[1], [0], [0], [1], [0, 0, 1, 1], [], []>} : vector<2x512xbf16>, vector<512x128xbf16>, vector<2x128xf32> -> vector<2x128xf32>
    %c0_9 = arith.constant 0 : index
    %c0_10 = arith.constant 0 : index
    %11 = vector.load %arg5[%c0_9, %c0_10] : memref<1x128xf32, #tpu.memory_space<vmem>>, vector<1x128xf32>
    %12 = vector.broadcast %11 : vector<1x128xf32> to vector<2x128xf32>
    %13 = arith.addf %10, %12 : vector<2x128xf32>
    %c0_11 = arith.constant 0 : index
    %c0_12 = arith.constant 0 : index
    %14 = vector.load %arg6[%c0_11, %c0_12] : memref<2x128xf32, #tpu.memory_space<vmem>>, vector<2x128xf32>
    tpu.vector_store %arg6[%c0_11, %c0_12], %13 {strides = array<i32>} : memref<2x128xf32, #tpu.memory_space<vmem>>, vector<2x128xf32>,
    return
  }
  func.func @transform_0(%arg0: i32) -> (i32, i32) {
    %c0_i32 = arith.constant 0 : i32
    %c0_i32_0 = arith.constant 0 : i32
    return %arg0, %c0_i32 : i32, i32
  }
  func.func @transform_1(%arg0: i32) -> (i32, i32) {
    %c0_i32 = arith.constant 0 : i32
    %c0_i32_0 = arith.constant 0 : i32
    %c0_i32_1 = arith.constant 0 : i32
    return %c0_i32, %c0_i32_0 : i32, i32
  }
  func.func @transform_2(%arg0: i32) -> (i32, i32) {
    %c0_i32 = arith.constant 0 : i32
    %c0_i32_0 = arith.constant 0 : i32
    %c0_i32_1 = arith.constant 0 : i32
    return %c0_i32, %c0_i32_0 : i32, i32
  }
  func.func @transform_3(%arg0: i32) -> (i32, i32) {
    %c0_i32 = arith.constant 0 : i32
    %c0_i32_0 = arith.constant 0 : i32
    %c0_i32_1 = arith.constant 0 : i32
    return %c0_i32, %c0_i32_0 : i32, i32
  }
  func.func @transform_4(%arg0: i32) -> (i32, i32) {
    %c0_i32 = arith.constant 0 : i32
    %c0_i32_0 = arith.constant 0 : i32
    %c0_i32_1 = arith.constant 0 : i32
    return %c0_i32, %c0_i32_0 : i32, i32
  }
  func.func @transform_5(%arg0: i32) -> (i32, i32) {
    %c0_i32 = arith.constant 0 : i32
    %c0_i32_0 = arith.constant 0 : i32
    return %arg0, %c0_i32 : i32, i32
  }
}

</mosaic_0001>

<llo_original>
// kernel: cnn_dqn_forward.4
$region0: #{cnn_dqn_forward.4}
  #allocation0 [shape = 'u32[]', space=smem, size = 0x4, offset = 0x4, fixed_abs, tag = 'smem constant byte address 0x4 - core index']
  #allocation1 [shape = 'u32[144,128]{1,0:T(1,128)}', space=vmem, size = 0x12000, scoped, tag = 'internal scratch']
  %s0 = inlined_call_operand.vmem [shape: bf16[128,256], index: 0, kind: input, shape index: {}]
  %s1 = inlined_call_operand.vmem [shape: bf16[256,128], index: 1, kind: input, shape index: {}]
  %s2 = inlined_call_operand.vmem [shape: f32[1,128], index: 2, kind: input, shape index: {}]
  %s3 = inlined_call_operand.vmem [shape: bf16[128,128], index: 3, kind: output, shape index: {}]
  %s4 = sld [smem:[#allocation0]]
  $region45: #{cnn_dqn_forward.4} parent=0
    _
  %s6 = ssub.s32 1, %s4
  %s7 = scalar_select 0, %s6, %s4
  loop: start=0, step=1, limit=4
  $region2: #{cnn_dqn_forward.4} parent=0 // loop_pre_header
    _
  $region3: #{cnn_dqn_forward.4} parent=0 // loop_header
    %s9 = sphi 0, %s13
    %p10 = scmp.ge.s32.totalorder %s9, 4
    %s19 = sphi 0, %s21
    %s22 = sphi 0, %s19
    %s23 = sphi 0, %s22
    %s39 = sphi 0, %s23
    %s43 = sphi 0, %s43
    %s45 = sphi 0, %s43
    %s46 = sphi 0, %s45
    %s60 = sphi 0, %s46
    %s64 = sphi 0, %s64
    %s66 = sphi 0, %s64
    %s67 = sphi 0, %s66
    %s81 = sphi 0, %s67
    %s87 = sphi 0, %s89
    %s90 = sphi 0, %s87
    %s91 = sphi 0, %s90
    %s107 = sphi 0, %s91
  $region4: #{cnn_dqn_forward.4} parent=0 // loop_header_branch
    %12 = sbr.rel (%p10) target = $region8
  $region5: #{cnn_dqn_forward.4} parent=0 // loop_body
    %s14 = ssub.s32 %s9, 1
    %s15 = ssub.s32 %s9, 2
    %s16 = sadd.s32 %s9, 1
    %s17 = ssub.s32 %s9, %s16
    %p18 = scmp.eq.s32.totalorder %s17, 0
    %s20 = sadd.s32 %s19, 1
    %s21 = scalar_select %p18, %s19, %s20
    %p24 = pneg %p18
    %p25 = scmp.eq.s32.totalorder %s9, 1
    %p26 = por %p24, %p25
    %p27 = scmp.ne.s32.totalorder %s19, %s22
    %p28 = scmp.eq.s32.totalorder %s9, 0
    %p29 = por %p27, %p28
    %p30 = scmp.ne.s32.totalorder %s19, %s22
    %p31 = scmp.eq.s32.totalorder %s14, 1
    %p32 = por %p30, %p31
    %p33 = scmp.ne.s32.totalorder %s22, %s23
    %p34 = scmp.eq.s32.totalorder %s14, 0
    %p35 = por %p33, %p34
    %p36 = scmp.ne.s32.totalorder %s22, %s23
    %p37 = scmp.eq.s32.totalorder %s15, 1
    %p38 = por %p36, %p37
    %p40 = scmp.ne.s32.totalorder %s23, %s39
    %p41 = scmp.eq.s32.totalorder %s15, 0
    %p42 = por %p40, %p41
    %s44 = sadd.s32 %s43, 1
    %p47 = scmp.eq.s32.totalorder %s9, 1
    %p48 = scmp.ne.s32.totalorder %s43, %s45
    %p49 = scmp.eq.s32.totalorder %s9, 0
    %p50 = por %p48, %p49
    %p51 = scmp.ne.s32.totalorder %s43, %s45
    %p52 = scmp.eq.s32.totalorder %s14, 1
    %p53 = por %p51, %p52
    %p54 = scmp.ne.s32.totalorder %s45, %s46
    %p55 = scmp.eq.s32.totalorder %s14, 0
    %p56 = por %p54, %p55
    %p57 = scmp.ne.s32.totalorder %s45, %s46
    %p58 = scmp.eq.s32.totalorder %s15, 1
    %p59 = por %p57, %p58
    %p61 = scmp.ne.s32.totalorder %s46, %s60
    %p62 = scmp.eq.s32.totalorder %s15, 0
    %p63 = por %p61, %p62
    %s65 = sadd.s32 %s64, 1
    %p68 = scmp.eq.s32.totalorder %s9, 1
    %p69 = scmp.ne.s32.totalorder %s64, %s66
    %p70 = scmp.eq.s32.totalorder %s9, 0
    %p71 = por %p69, %p70
    %p72 = scmp.ne.s32.totalorder %s64, %s66
    %p73 = scmp.eq.s32.totalorder %s14, 1
    %p74 = por %p72, %p73
    %p75 = scmp.ne.s32.totalorder %s66, %s67
    %p76 = scmp.eq.s32.totalorder %s14, 0
    %p77 = por %p75, %p76
    %p78 = scmp.ne.s32.totalorder %s66, %s67
    %p79 = scmp.eq.s32.totalorder %s15, 1
    %p80 = por %p78, %p79
    %p82 = scmp.ne.s32.totalorder %s67, %s81
    %p83 = scmp.eq.s32.totalorder %s15, 0
    %p84 = por %p82, %p83
    %s85 = ssub.s32 %s9, %s16
    %p86 = scmp.eq.s32.totalorder %s85, 0
    %s88 = sadd.s32 %s87, 1
    %s89 = scalar_select %p86, %s87, %s88
    %p92 = pneg %p86
    %p93 = scmp.eq.s32.totalorder %s9, 1
    %p94 = por %p92, %p93
    %p95 = scmp.ne.s32.totalorder %s87, %s90
    %p96 = scmp.eq.s32.totalorder %s9, 0
    %p97 = por %p95, %p96
    %p98 = scmp.ne.s32.totalorder %s87, %s90
    %p99 = scmp.eq.s32.totalorder %s14, 1
    %p100 = por %p98, %p99
    %p101 = scmp.ne.s32.totalorder %s90, %s91
    %p102 = scmp.eq.s32.totalorder %s14, 0
    %p103 = por %p101, %p102
    %p104 = scmp.ne.s32.totalorder %s90, %s91
    %p105 = scmp.eq.s32.totalorder %s15, 1
    %p106 = por %p104, %p105
    %p108 = scmp.ne.s32.totalorder %s91, %s107
    %p109 = scmp.eq.s32.totalorder %s15, 0
    %p110 = por %p108, %p109
    %p111 = scmp.le.s32.totalorder 1, %s9
    %p112 = scmp.lt.s32.totalorder %s9, 3
    %p113 = pnand %p111, %p112
    %p114 = pneg %p113
    // Predicated region
    $region9: #{cnn_dqn_forward.4} parent=5 // pred_check
      _
    $region10: #{cnn_dqn_forward.4} parent=5 // pred_check_branch
      %116 = sbr.rel (%p113) target = $region12
    $region11: #{cnn_dqn_forward.4} parent=5 // pred_region
      %s117 = ssub.s32 %s9, 1
      // Predicated region
      $region13: #{cnn_dqn_forward.4} parent=11 // pred_check
        %p118 = pneg %p56
      $region14: #{cnn_dqn_forward.4} parent=11 // pred_check_branch
        %120 = sbr.rel (%p118) target = $region16
      $region15: #{cnn_dqn_forward.4} parent=11 // pred_region
        _
      $region16: #{cnn_dqn_forward.4} parent=11 // pred_fallthru
        _
      // Predicated region
      $region17: #{cnn_dqn_forward.4} parent=11 // pred_check
        %p121 = pneg %p77
      $region18: #{cnn_dqn_forward.4} parent=11 // pred_check_branch
        %123 = sbr.rel (%p121) target = $region20
      $region19: #{cnn_dqn_forward.4} parent=11 // pred_region
        _
      $region20: #{cnn_dqn_forward.4} parent=11 // pred_fallthru
        _
    $region12: #{cnn_dqn_forward.4} parent=5 // pred_fallthru
      _
    %p124 = scmp.lt.s32.totalorder %s9, 2
    // Predicated region
    $region21: #{cnn_dqn_forward.4} parent=5 // pred_check
      %p125 = pneg %p124
    $region22: #{cnn_dqn_forward.4} parent=5 // pred_check_branch
      %127 = sbr.rel (%p125) target = $region24
    $region23: #{cnn_dqn_forward.4} parent=5 // pred_region
      // Predicated region
      $region25: #{cnn_dqn_forward.4} parent=23 // pred_check
        %p128 = pneg %p29
      $region26: #{cnn_dqn_forward.4} parent=23 // pred_check_branch
        %130 = sbr.rel (%p128) target = $region28
      $region27: #{cnn_dqn_forward.4} parent=23 // pred_region
        %s131 = smul.u32 8, %s9
        %p132 = scmp.lt.s32.totalorder %s131, 15
        %s133 = scalar_select %p132, %s131, 15
        %s134 = smul.addr %s133, 2
        %s135 = smul.addr %s134, 4
        %s136 = scalar_lea.vmem %s0, %s135
        %s137 = smul.u32 8, %s9
      $region28: #{cnn_dqn_forward.4} parent=23 // pred_fallthru
        _
    $region24: #{cnn_dqn_forward.4} parent=5 // pred_fallthru
      _
    %p138 = scmp.le.s32.totalorder 1, %s9
    %p139 = scmp.lt.s32.totalorder %s9, 3
    %p140 = pnand %p138, %p139
    %p141 = pneg %p140
    // Predicated region
    $region29: #{cnn_dqn_forward.4} parent=5 // pred_check
      _
    $region30: #{cnn_dqn_forward.4} parent=5 // pred_check_branch
      %143 = sbr.rel (%p140) target = $region32
    $region31: #{cnn_dqn_forward.4} parent=5 // pred_region
      %s144 = ssub.s32 %s9, 1
      %s145 = smul.u32 8, %s14
      %p146 = scmp.lt.s32.totalorder %s145, 15
      %s147 = scalar_select %p146, %s145, 15
      %s148 = smul.addr %s147, 2
      %s149 = smul.addr %s148, 4
      %s150 = scalar_lea.vmem %s0, %s149
      %p151 = pneg %p35
      %p152 = pneg %p32
      %p153 = pneg %p56
      %p154 = pneg %p53
      %p155 = pneg %p77
      %p156 = pneg %p74
      %p157 = pneg %p103
      %p158 = pneg %p100
      %s159 = smul.u32 8, %s14
      %p160 = scmp.lt.s32.totalorder %s159, 15
      %s161 = scalar_select %p160, %s159, 15
      %s162 = smul.addr %s161, 4
      %s163 = scalar_lea.vmem %s3, %s162
      %s164 = smul.u32 8, %s14
      %p165 = scmp.lt.s32.totalorder %s164, 15
      %s166 = scalar_select %p165, %s164, 15
      %s167 = smul.addr %s166, 2
      %s168 = smul.addr %s167, 4
      %s169 = scalar_lea.vmem %s0, %s168
      %s170 = smul.u32 8, %s14
      %s171 = smul.u32 8, %s14
      %p172 = scmp.lt.s32.totalorder %s171, 15
      %s173 = scalar_select %p172, %s171, 15
      %s174 = smul.addr %s173, 4
      %s175 = scalar_lea.vmem %s3, %s174
      %s176 = smul.u32 8, %s14
      %v178 = vld [vmem:[%s169] sm:$0xff]
      %v179 = vld [vmem:[%s169 + $0x8] sm:$0xff]
      %v180 = vld [vmem:[%s169 + $0x10] sm:$0xff]
      %v181 = vld [vmem:[%s169 + $0x18] sm:$0xff]
      %v182 = vld [vmem:[%s169 + $0x20] sm:$0xff]
      %v183 = vld [vmem:[%s169 + $0x28] sm:$0xff]
      %v184 = vld [vmem:[%s169 + $0x30] sm:$0xff]
      %v185 = vld [vmem:[%s169 + $0x38] sm:$0xff]
      %v186 = vld [vmem:[%s1] sm:$0xf]
      %v187 = vld [vmem:[%s1 + $0x4] sm:$0xf]
      %v188 = vld [vmem:[%s1 + $0x8] sm:$0xf]
      %v189 = vld [vmem:[%s1 + $0xc] sm:$0xf]
      %v190 = vld [vmem:[%s1 + $0x10] sm:$0xf]
      %v191 = vld [vmem:[%s1 + $0x14] sm:$0xf]
      %v192 = vld [vmem:[%s1 + $0x18] sm:$0xf]
      %v193 = vld [vmem:[%s1 + $0x1c] sm:$0xf]
      %v194 = vld [vmem:[%s1 + $0x20] sm:$0xf]
      %v195 = vld [vmem:[%s1 + $0x24] sm:$0xf]
      %v196 = vld [vmem:[%s1 + $0x28] sm:$0xf]
      %v197 = vld [vmem:[%s1 + $0x2c] sm:$0xf]
      %v198 = vld [vmem:[%s1 + $0x30] sm:$0xf]
      %v199 = vld [vmem:[%s1 + $0x34] sm:$0xf]
      %v200 = vld [vmem:[%s1 + $0x38] sm:$0xf]
      %v201 = vld [vmem:[%s1 + $0x3c] sm:$0xf]
      %v202 = vld [vmem:[%s1 + $0x40] sm:$0xf]
      %v203 = vld [vmem:[%s1 + $0x44] sm:$0xf]
      %v204 = vld [vmem:[%s1 + $0x48] sm:$0xf]
      %v205 = vld [vmem:[%s1 + $0x4c] sm:$0xf]
      %v206 = vld [vmem:[%s1 + $0x50] sm:$0xf]
      %v207 = vld [vmem:[%s1 + $0x54] sm:$0xf]
      %v208 = vld [vmem:[%s1 + $0x58] sm:$0xf]
      %v209 = vld [vmem:[%s1 + $0x5c] sm:$0xf]
      %v210 = vld [vmem:[%s1 + $0x60] sm:$0xf]
      %v211 = vld [vmem:[%s1 + $0x64] sm:$0xf]
      %v212 = vld [vmem:[%s1 + $0x68] sm:$0xf]
      %v213 = vld [vmem:[%s1 + $0x6c] sm:$0xf]
      %v214 = vld [vmem:[%s1 + $0x70] sm:$0xf]
      %v215 = vld [vmem:[%s1 + $0x74] sm:$0xf]
      %v216 = vld [vmem:[%s1 + $0x78] sm:$0xf]
      %v217 = vld [vmem:[%s1 + $0x7c] sm:$0xf]
      %v218 = vld [vmem:[%s2] sm:$0x1]
      %v220 = vlaneseq
      %v221 = vshrl.u32 %v220, 7
      %v222 = vsub.s32 0, %v221
      %v223 = vrot.slane %v218, %v222
      %v233 = vunpack.c.l.b16 %v178
      %v234 = vunpack.c.h.b16 %v178
      %v235 = vunpack.c.l.b16 %v179
      %v236 = vunpack.c.h.b16 %v179
      %v237 = vunpack.c.l.b16 %v180
      %v238 = vunpack.c.h.b16 %v180
      %v239 = vunpack.c.l.b16 %v181
      %v240 = vunpack.c.h.b16 %v181
      %v241 = vunpack.c.l.b16 %v182
      %v242 = vunpack.c.h.b16 %v182
      %v243 = vunpack.c.l.b16 %v183
      %v244 = vunpack.c.h.b16 %v183
      %v245 = vunpack.c.l.b16 %v184
      %v246 = vunpack.c.h.b16 %v184
      %v247 = vunpack.c.l.b16 %v185
      %v248 = vunpack.c.h.b16 %v185
      %v249 = vpack.c.b16 %v235, %v233
      %v250 = vpack.c.b16 %v236, %v234
      %v251 = vpack.c.b16 %v239, %v237
      %v252 = vpack.c.b16 %v240, %v238
      %v253 = vpack.c.b16 %v243, %v241
      %v254 = vpack.c.b16 %v244, %v242
      %v255 = vpack.c.b16 %v247, %v245
      %v256 = vpack.c.b16 %v248, %v246
      %v297 = vunpack.c.l.b16 %v186
      %v298 = vunpack.c.l.b16 %v187
      %v299 = vunpack.c.l.b16 %v188
      %v300 = vunpack.c.l.b16 %v189
      %v301 = vunpack.c.l.b16 %v190
      %v302 = vunpack.c.l.b16 %v191
      %v303 = vunpack.c.l.b16 %v192
      %v304 = vunpack.c.l.b16 %v193
      %v305 = vunpack.c.l.b16 %v194
      %v306 = vunpack.c.l.b16 %v195
      %v307 = vunpack.c.l.b16 %v196
      %v308 = vunpack.c.l.b16 %v197
      %v309 = vunpack.c.l.b16 %v198
      %v310 = vunpack.c.l.b16 %v199
      %v311 = vunpack.c.l.b16 %v200
      %v312 = vunpack.c.l.b16 %v201
      %v313 = vunpack.c.l.b16 %v202
      %v314 = vunpack.c.l.b16 %v203
      %v315 = vunpack.c.l.b16 %v204
      %v316 = vunpack.c.l.b16 %v205
      %v317 = vunpack.c.l.b16 %v206
      %v318 = vunpack.c.l.b16 %v207
      %v319 = vunpack.c.l.b16 %v208
      %v320 = vunpack.c.l.b16 %v209
      %v321 = vunpack.c.l.b16 %v210
      %v322 = vunpack.c.l.b16 %v211
      %v323 = vunpack.c.l.b16 %v212
      %v324 = vunpack.c.l.b16 %v213
      %v325 = vunpack.c.l.b16 %v214
      %v326 = vunpack.c.l.b16 %v215
      %v327 = vunpack.c.l.b16 %v216
      %v328 = vunpack.c.l.b16 %v217
      %v329 = vpack.c.b16 %v298, %v297
      %v330 = vpack.c.b16 %v300, %v299
      %v331 = vpack.c.b16 %v302, %v301
      %v332 = vpack.c.b16 %v304, %v303
      %v333 = vpack.c.b16 %v306, %v305
      %v334 = vpack.c.b16 %v308, %v307
      %v335 = vpack.c.b16 %v310, %v309
      %v336 = vpack.c.b16 %v312, %v311
      %v337 = vpack.c.b16 %v314, %v313
      %v338 = vpack.c.b16 %v316, %v315
      %v339 = vpack.c.b16 %v318, %v317
      %v340 = vpack.c.b16 %v320, %v319
      %v341 = vpack.c.b16 %v322, %v321
      %v342 = vpack.c.b16 %v324, %v323
      %v343 = vpack.c.b16 %v326, %v325
      %v344 = vpack.c.b16 %v328, %v327
      %361 = vmatprep.subr.bf16.mxu0 0
      %362 = vmatpush1.bf16.msra.mxu0 %v336
      %363 = vmatprep.subr.bf16.mxu0 0
      %364 = vmatpush1.bf16.msra.mxu0 %v335
      %365 = vmatprep.subr.bf16.mxu0 0
      %366 = vmatpush1.bf16.msra.mxu0 %v334
      %367 = vmatprep.subr.bf16.mxu0 0
      %368 = vmatpush1.bf16.msra.mxu0 %v333
      %369 = vmatprep.subr.bf16.mxu0 0
      %370 = vmatpush1.bf16.msra.mxu0 %v332
      %371 = vmatprep.subr.bf16.mxu0 0
      %372 = vmatpush1.bf16.msra.mxu0 %v331
      %373 = vmatprep.subr.bf16.mxu0 0
      %374 = vmatpush1.bf16.msra.mxu0 %v330
      %375 = vmatprep.subr.bf16.mxu0 0
      %376 = vmatpush1.bf16.msra.mxu0 %v329
      %377 = vmatprep.subr.bf16.mxu0 0
      %378 = vmatpush2.bf16.msra.mxu0 %v344
      %379 = vmatprep.subr.bf16.mxu0 0
      %380 = vmatpush2.bf16.msra.mxu0 %v343
      %381 = vmatprep.subr.bf16.mxu0 0
      %382 = vmatpush2.bf16.msra.mxu0 %v342
      %383 = vmatprep.subr.bf16.mxu0 0
      %384 = vmatpush2.bf16.msra.mxu0 %v341
      %385 = vmatprep.subr.bf16.mxu0 0
      %386 = vmatpush2.bf16.msra.mxu0 %v340
      %387 = vmatprep.subr.bf16.mxu0 0
      %388 = vmatpush2.bf16.msra.mxu0 %v339
      %389 = vmatprep.subr.bf16.mxu0 0
      %390 = vmatpush2.bf16.msra.mxu0 %v338
      %391 = vmatprep.subr.bf16.mxu0 0
      %392 = vmatpush2.bf16.msra.mxu0 %v337
      %393 = vmatprep.mubr.bf16.mxu0 %v250
      %394 = vmatmul.mubr.bf16.gmra.mxu0 %v249
      %v395 = vpop.f32.mrf.mxu0
      %v396 = vadd.f32 %v223, %v395
      %v397 = vpop.f32.mrf.mxu0
      %v398 = vpop.f32.mrf.mxu0
      %v399 = vadd.f32 %v223, %v398
      %v400 = vpop.f32.mrf.mxu0
      %401 = vmatprep.mubr.bf16.mxu0 %v252
      %402 = vmatmul.mubr.bf16.gmra.mxu0 %v251
      %v403 = vpop.f32.mrf.mxu0
      %v404 = vadd.f32 %v223, %v403
      %v405 = vpop.f32.mrf.mxu0
      %v406 = vpop.f32.mrf.mxu0
      %v407 = vadd.f32 %v223, %v406
      %v408 = vpop.f32.mrf.mxu0
      %409 = vmatprep.mubr.bf16.mxu0 %v254
      %410 = vmatmul.mubr.bf16.gmra.mxu0 %v253
      %v411 = vpop.f32.mrf.mxu0
      %v412 = vadd.f32 %v223, %v411
      %v413 = vpop.f32.mrf.mxu0
      %v414 = vpop.f32.mrf.mxu0
      %v415 = vadd.f32 %v223, %v414
      %v416 = vpop.f32.mrf.mxu0
      %417 = vmatprep.mubr.bf16.mxu0 %v256
      %418 = vmatmul.mubr.bf16.gmra.mxu0 %v255
      %v419 = vpop.f32.mrf.mxu0
      %v420 = vadd.f32 %v223, %v419
      %v421 = vpop.f32.mrf.mxu0
      %v422 = vpop.f32.mrf.mxu0
      %v423 = vadd.f32 %v223, %v422
      %v424 = vpop.f32.mrf.mxu0
      %425 = vdwg.mxu0
      %v426 = vmax.f32 %v396, 0.0
      %v427 = vmax.f32 %v399, 0.0
      %v428 = vmax.f32 %v404, 0.0
      %v429 = vmax.f32 %v407, 0.0
      %v430 = vmax.f32 %v412, 0.0
      %v431 = vmax.f32 %v415, 0.0
      %v432 = vmax.f32 %v420, 0.0
      %v433 = vmax.f32 %v423, 0.0
      %v434 = vpack.c.bf16 %v427, %v426
      %v435 = vpack.c.bf16 %v429, %v428
      %v436 = vpack.c.bf16 %v431, %v430
      %v437 = vpack.c.bf16 %v433, %v432
      %v442 = vunpack.c.l.b16 %v434
      %v443 = vunpack.c.h.b16 %v434
      %v444 = vunpack.c.l.b16 %v435
      %v445 = vunpack.c.h.b16 %v435
      %v446 = vunpack.c.l.b16 %v436
      %v447 = vunpack.c.h.b16 %v436
      %v448 = vunpack.c.l.b16 %v437
      %v449 = vunpack.c.h.b16 %v437
      %v450 = vpack.c.b16 %v442, %v442
      %v451 = vpack.c.b16 %v443, %v443
      %v452 = vpack.c.b16 %v444, %v444
      %v453 = vpack.c.b16 %v445, %v445
      %v454 = vpack.c.b16 %v446, %v446
      %v455 = vpack.c.b16 %v447, %v447
      %v456 = vpack.c.b16 %v448, %v448
      %v457 = vpack.c.b16 %v449, %v449
      %466 = vst [vmem:[%s175] sm:$0xf] %v450
      %467 = vst [vmem:[%s175 + $0x4] sm:$0xf] %v451
      %468 = vst [vmem:[%s175 + $0x8] sm:$0xf] %v452
      %469 = vst [vmem:[%s175 + $0xc] sm:$0xf] %v453
      %470 = vst [vmem:[%s175 + $0x10] sm:$0xf] %v454
      %471 = vst [vmem:[%s175 + $0x14] sm:$0xf] %v455
      %472 = vst [vmem:[%s175 + $0x18] sm:$0xf] %v456
      %473 = vst [vmem:[%s175 + $0x1c] sm:$0xf] %v457
      %s474 = smul.u32 8, %s14
      %p475 = scmp.lt.s32.totalorder %s474, 15
      %s476 = scalar_select %p475, %s474, 15
      %s477 = smul.addr %s476, 4
      %s478 = scalar_lea.vmem %s3, %s477
      // Predicated region
      $region33: #{cnn_dqn_forward.4} parent=31 // pred_check
        %p479 = pneg %p100
      $region34: #{cnn_dqn_forward.4} parent=31 // pred_check_branch
        %481 = sbr.rel (%p479) target = $region36
      $region35: #{cnn_dqn_forward.4} parent=31 // pred_region
        %s482 = smul.u32 8, %s14
      $region36: #{cnn_dqn_forward.4} parent=31 // pred_fallthru
        _
    $region32: #{cnn_dqn_forward.4} parent=5 // pred_fallthru
      _
    %p483 = scmp.le.s32.totalorder 2, %s9
    // Predicated region
    $region37: #{cnn_dqn_forward.4} parent=5 // pred_check
      %p484 = pneg %p483
    $region38: #{cnn_dqn_forward.4} parent=5 // pred_check_branch
      %486 = sbr.rel (%p484) target = $region40
    $region39: #{cnn_dqn_forward.4} parent=5 // pred_region
      %s487 = ssub.s32 %s9, 2
      // Predicated region
      $region41: #{cnn_dqn_forward.4} parent=39 // pred_check
        %p488 = pneg %p106
      $region42: #{cnn_dqn_forward.4} parent=39 // pred_check_branch
        %490 = sbr.rel (%p488) target = $region44
      $region43: #{cnn_dqn_forward.4} parent=39 // pred_region
        %s491 = smul.u32 8, %s15
        %p492 = scmp.lt.s32.totalorder %s491, 15
        %s493 = scalar_select %p492, %s491, 15
        %s494 = smul.addr %s493, 4
        %s495 = scalar_lea.vmem %s3, %s494
      $region44: #{cnn_dqn_forward.4} parent=39 // pred_fallthru
        _
    $region40: #{cnn_dqn_forward.4} parent=5 // pred_fallthru
      _
  $region6: #{cnn_dqn_forward.4} parent=0 // loop_footer
    %s13 = sadd.s32 1, %s9
  $region7: #{cnn_dqn_forward.4} parent=0 // loop_footer_branch
    %8 = sbr.rel target = $region3
  $region8: #{cnn_dqn_forward.4} parent=0 // loop_exit
    _

// kernel: cnn_dqn_forward.5
$region0: #{cnn_dqn_forward.5}
  #allocation0 [shape = 'u32[]', space=smem, size = 0x4, offset = 0x4, fixed_abs, tag = 'smem constant byte address 0x4 - core index']
  #allocation1 [shape = 'u32[144,128]{1,0:T(1,128)}', space=vmem, size = 0x12000, scoped, tag = 'internal scratch']
  %s0 = inlined_call_operand.vmem [shape: bf16[18,512], index: 0, kind: input, shape index: {}]
  %s1 = inlined_call_operand.vmem [shape: bf16[512,128], index: 1, kind: input, shape index: {}]
  %s2 = inlined_call_operand.vmem [shape: f32[1,128], index: 2, kind: input, shape index: {}]
  %s3 = inlined_call_operand.vmem [shape: bf16[18,128], index: 3, kind: output, shape index: {}]
  %s4 = sld [smem:[#allocation0]]
  $region89: #{cnn_dqn_forward.5} parent=0
    _
  %s6 = ssub.s32 1, %s4
  %s7 = scalar_select 0, %s6, %s4
  $region1: #{cnn_dqn_forward.5} parent=0
    #allocation2 [shape = 'u8[8192]{0}', space=vmem, size = 0x2000, scoped, tag = 'output window, operand 0']
    loop: start=0, step=1, limit=4
    $region2: #{cnn_dqn_forward.5} parent=1 // loop_pre_header
      _
    $region3: #{cnn_dqn_forward.5} parent=1 // loop_header
      %s9 = sphi 0, %s13
      %p10 = scmp.ge.s32.totalorder %s9, 4
      %s19 = sphi 0, %s21
      %s22 = sphi 0, %s19
      %s23 = sphi 0, %s22
      %s39 = sphi 0, %s23
      %s43 = sphi 0, %s43
      %s45 = sphi 0, %s43
      %s46 = sphi 0, %s45
      %s60 = sphi 0, %s46
      %s64 = sphi 0, %s64
      %s66 = sphi 0, %s64
      %s67 = sphi 0, %s66
      %s81 = sphi 0, %s67
      %s87 = sphi 0, %s89
      %s90 = sphi 0, %s87
      %s91 = sphi 0, %s90
      %s107 = sphi 0, %s91
    $region4: #{cnn_dqn_forward.5} parent=1 // loop_header_branch
      %12 = sbr.rel (%p10) target = $region8
    $region5: #{cnn_dqn_forward.5} parent=1 // loop_body
      %s14 = ssub.s32 %s9, 1
      %s15 = ssub.s32 %s9, 2
      %s16 = sadd.s32 %s9, 1
      %s17 = ssub.s32 %s9, %s16
      %p18 = scmp.eq.s32.totalorder %s17, 0
      %s20 = sadd.s32 %s19, 1
      %s21 = scalar_select %p18, %s19, %s20
      %p24 = pneg %p18
      %p25 = scmp.eq.s32.totalorder %s9, 1
      %p26 = por %p24, %p25
      %p27 = scmp.ne.s32.totalorder %s19, %s22
      %p28 = scmp.eq.s32.totalorder %s9, 0
      %p29 = por %p27, %p28
      %p30 = scmp.ne.s32.totalorder %s19, %s22
      %p31 = scmp.eq.s32.totalorder %s14, 1
      %p32 = por %p30, %p31
      %p33 = scmp.ne.s32.totalorder %s22, %s23
      %p34 = scmp.eq.s32.totalorder %s14, 0
      %p35 = por %p33, %p34
      %p36 = scmp.ne.s32.totalorder %s22, %s23
      %p37 = scmp.eq.s32.totalorder %s15, 1
      %p38 = por %p36, %p37
      %p40 = scmp.ne.s32.totalorder %s23, %s39
      %p41 = scmp.eq.s32.totalorder %s15, 0
      %p42 = por %p40, %p41
      %s44 = sadd.s32 %s43, 1
      %p47 = scmp.eq.s32.totalorder %s9, 1
      %p48 = scmp.ne.s32.totalorder %s43, %s45
      %p49 = scmp.eq.s32.totalorder %s9, 0
      %p50 = por %p48, %p49
      %p51 = scmp.ne.s32.totalorder %s43, %s45
      %p52 = scmp.eq.s32.totalorder %s14, 1
      %p53 = por %p51, %p52
      %p54 = scmp.ne.s32.totalorder %s45, %s46
      %p55 = scmp.eq.s32.totalorder %s14, 0
      %p56 = por %p54, %p55
      %p57 = scmp.ne.s32.totalorder %s45, %s46
      %p58 = scmp.eq.s32.totalorder %s15, 1
      %p59 = por %p57, %p58
      %p61 = scmp.ne.s32.totalorder %s46, %s60
      %p62 = scmp.eq.s32.totalorder %s15, 0
      %p63 = por %p61, %p62
      %s65 = sadd.s32 %s64, 1
      %p68 = scmp.eq.s32.totalorder %s9, 1
      %p69 = scmp.ne.s32.totalorder %s64, %s66
      %p70 = scmp.eq.s32.totalorder %s9, 0
      %p71 = por %p69, %p70
      %p72 = scmp.ne.s32.totalorder %s64, %s66
      %p73 = scmp.eq.s32.totalorder %s14, 1
      %p74 = por %p72, %p73
      %p75 = scmp.ne.s32.totalorder %s66, %s67
      %p76 = scmp.eq.s32.totalorder %s14, 0
      %p77 = por %p75, %p76
      %p78 = scmp.ne.s32.totalorder %s66, %s67
      %p79 = scmp.eq.s32.totalorder %s15, 1
      %p80 = por %p78, %p79
      %p82 = scmp.ne.s32.totalorder %s67, %s81
      %p83 = scmp.eq.s32.totalorder %s15, 0
      %p84 = por %p82, %p83
      %s85 = ssub.s32 %s9, %s16
      %p86 = scmp.eq.s32.totalorder %s85, 0
      %s88 = sadd.s32 %s87, 1
      %s89 = scalar_select %p86, %s87, %s88
      %p92 = pneg %p86
      %p93 = scmp.eq.s32.totalorder %s9, 1
      %p94 = por %p92, %p93
      %p95 = scmp.ne.s32.totalorder %s87, %s90
      %p96 = scmp.eq.s32.totalorder %s9, 0
      %p97 = por %p95, %p96
      %p98 = scmp.ne.s32.totalorder %s87, %s90
      %p99 = scmp.eq.s32.totalorder %s14, 1
      %p100 = por %p98, %p99
      %p101 = scmp.ne.s32.totalorder %s90, %s91
      %p102 = scmp.eq.s32.totalorder %s14, 0
      %p103 = por %p101, %p102
      %p104 = scmp.ne.s32.totalorder %s90, %s91
      %p105 = scmp.eq.s32.totalorder %s15, 1
      %p106 = por %p104, %p105
      %p108 = scmp.ne.s32.totalorder %s91, %s107
      %p109 = scmp.eq.s32.totalorder %s15, 0
      %p110 = por %p108, %p109
      %p111 = scmp.le.s32.totalorder 1, %s9
      %p112 = scmp.lt.s32.totalorder %s9, 3
      %p113 = pnand %p111, %p112
      %p114 = pneg %p113
      // Predicated region
      $region9: #{cnn_dqn_forward.5} parent=5 // pred_check
        _
      $region10: #{cnn_dqn_forward.5} parent=5 // pred_check_branch
        %116 = sbr.rel (%p113) target = $region12
      $region11: #{cnn_dqn_forward.5} parent=5 // pred_region
        %s117 = ssub.s32 %s9, 1
        // Predicated region
        $region13: #{cnn_dqn_forward.5} parent=11 // pred_check
          %p118 = pneg %p56
        $region14: #{cnn_dqn_forward.5} parent=11 // pred_check_branch
          %120 = sbr.rel (%p118) target = $region16
        $region15: #{cnn_dqn_forward.5} parent=11 // pred_region
          _
        $region16: #{cnn_dqn_forward.5} parent=11 // pred_fallthru
          _
        // Predicated region
        $region17: #{cnn_dqn_forward.5} parent=11 // pred_check
          %p121 = pneg %p77
        $region18: #{cnn_dqn_forward.5} parent=11 // pred_check_branch
          %123 = sbr.rel (%p121) target = $region20
        $region19: #{cnn_dqn_forward.5} parent=11 // pred_region
          _
        $region20: #{cnn_dqn_forward.5} parent=11 // pred_fallthru
          _
      $region12: #{cnn_dqn_forward.5} parent=5 // pred_fallthru
        _
      %p124 = scmp.lt.s32.totalorder %s9, 2
      // Predicated region
      $region21: #{cnn_dqn_forward.5} parent=5 // pred_check
        %p125 = pneg %p124
      $region22: #{cnn_dqn_forward.5} parent=5 // pred_check_branch
        %127 = sbr.rel (%p125) target = $region24
      $region23: #{cnn_dqn_forward.5} parent=5 // pred_region
        // Predicated region
        $region25: #{cnn_dqn_forward.5} parent=23 // pred_check
          %p128 = pneg %p29
        $region26: #{cnn_dqn_forward.5} parent=23 // pred_check_branch
          %130 = sbr.rel (%p128) target = $region28
        $region27: #{cnn_dqn_forward.5} parent=23 // pred_region
          %s131 = smul.u32 2, %s9
          %s132 = ssub.s32 3, %s131
          %p133 = scmp.lt.s32.totalorder %s132, 2
          %s134 = scalar_select %p133, %s132, 2
          %s135 = smul.u32 64, %s134
          %s136 = smul.u32 %s135, 4
          %p137 = scmp.lt.s32.totalorder %s131, 2
          %s138 = scalar_select %p137, %s131, 2
          %s139 = smul.addr %s138, 4
          %s140 = smul.addr %s139, 4
          %s141 = scalar_lea.vmem %s0, %s140
          %s142 = smul.u32 2, %s9
          %s143 = ssub.s32 3, %s142
          %p144 = scmp.lt.s32.totalorder %s143, 2
          %s145 = scalar_select %p144, %s143, 2
          %s146 = smul.u32 64, %s145
          %s147 = smul.u32 %s146, 4
        $region28: #{cnn_dqn_forward.5} parent=23 // pred_fallthru
          _
      $region24: #{cnn_dqn_forward.5} parent=5 // pred_fallthru
        _
      %p148 = scmp.le.s32.totalorder 1, %s9
      %p149 = scmp.lt.s32.totalorder %s9, 3
      %p150 = pnand %p148, %p149
      %p151 = pneg %p150
      // Predicated region
      $region29: #{cnn_dqn_forward.5} parent=5 // pred_check
        _
      $region30: #{cnn_dqn_forward.5} parent=5 // pred_check_branch
        %153 = sbr.rel (%p150) target = $region32
      $region31: #{cnn_dqn_forward.5} parent=5 // pred_region
        %s154 = ssub.s32 %s9, 1
        %s155 = smul.u32 2, %s14
        %s156 = ssub.s32 3, %s155
        %p157 = scmp.lt.s32.totalorder %s156, 2
        %s158 = scalar_select %p157, %s156, 2
        %s159 = smul.u32 64, %s158
        %s160 = smul.u32 %s159, 4
        %p161 = scmp.lt.s32.totalorder %s155, 2
        %s162 = scalar_select %p161, %s155, 2
        %s163 = smul.addr %s162, 4
        %s164 = smul.addr %s163, 4
        %s165 = scalar_lea.vmem %s0, %s164
        %p166 = pneg %p35
        %p167 = pneg %p32
        %p168 = pneg %p56
        %p169 = pneg %p53
        %p170 = pneg %p77
        %p171 = pneg %p74
        %p172 = pneg %p103
        %p173 = pneg %p100
        %s174 = sand.u32 %s90, 1
        %s175 = sand.u32 %s90, 1
        %s176 = smul.addr %s175, 8
        %s177 = scalar_lea.vmem [#allocation2], %s176
        %s178 = smul.u32 2, %s14
        %s179 = ssub.s32 3, %s178
        %p180 = scmp.lt.s32.totalorder %s179, 2
        %s181 = scalar_select %p180, %s179, 2
        %s182 = smul.u32 64, %s181
        %s183 = smul.u32 %s182, 4
        %p184 = scmp.lt.s32.totalorder %s178, 2
        %s185 = scalar_select %p184, %s178, 2
        %s186 = smul.addr %s185, 4
        %s187 = smul.addr %s186, 4
        %s188 = scalar_lea.vmem %s0, %s187
        %s189 = smul.u32 2, %s14
        %s190 = ssub.s32 3, %s189
        %p191 = scmp.lt.s32.totalorder %s190, 2
        %s192 = scalar_select %p191, %s190, 2
        %s193 = smul.u32 64, %s192
        %s194 = smul.u32 %s193, 4
        %s195 = smul.u32 2, %s14
        %s196 = ssub.s32 3, %s195
        %p197 = scmp.lt.s32.totalorder %s196, 2
        %s198 = scalar_select %p197, %s196, 2
        %s199 = smul.u32 64, %s198
        %v201 = vld [vmem:[%s188] sm:$0xff]
        %v202 = vld [vmem:[%s188 + $0x8] sm:$0xff]
        %v203 = vld [vmem:[%s188 + $0x10] sm:$0xff]
        %v204 = vld [vmem:[%s188 + $0x18] sm:$0xff]
        %v205 = vld [vmem:[%s1] sm:$0xf]
        %v206 = vld [vmem:[%s1 + $0x4] sm:$0xf]
        %v207 = vld [vmem:[%s1 + $0x8] sm:$0xf]
        %v208 = vld [vmem:[%s1 + $0xc] sm:$0xf]
        %v209 = vld [vmem:[%s1 + $0x10] sm:$0xf]
        %v210 = vld [vmem:[%s1 + $0x14] sm:$0xf]
        %v211 = vld [vmem:[%s1 + $0x18] sm:$0xf]
        %v212 = vld [vmem:[%s1 + $0x1c] sm:$0xf]
        %v213 = vld [vmem:[%s1 + $0x20] sm:$0xf]
        %v214 = vld [vmem:[%s1 + $0x24] sm:$0xf]
        %v215 = vld [vmem:[%s1 + $0x28] sm:$0xf]
        %v216 = vld [vmem:[%s1 + $0x2c] sm:$0xf]
        %v217 = vld [vmem:[%s1 + $0x30] sm:$0xf]
        %v218 = vld [vmem:[%s1 + $0x34] sm:$0xf]
        %v219 = vld [vmem:[%s1 + $0x38] sm:$0xf]
        %v220 = vld [vmem:[%s1 + $0x3c] sm:$0xf]
        %v221 = vld [vmem:[%s1 + $0x40] sm:$0xf]
        %v222 = vld [vmem:[%s1 + $0x44] sm:$0xf]
        %v223 = vld [vmem:[%s1 + $0x48] sm:$0xf]
        %v224 = vld [vmem:[%s1 + $0x4c] sm:$0xf]
        %v225 = vld [vmem:[%s1 + $0x50] sm:$0xf]
        %v226 = vld [vmem:[%s1 + $0x54] sm:$0xf]
        %v227 = vld [vmem:[%s1 + $0x58] sm:$0xf]
        %v228 = vld [vmem:[%s1 + $0x5c] sm:$0xf]
        %v229 = vld [vmem:[%s1 + $0x60] sm:$0xf]
        %v230 = vld [vmem:[%s1 + $0x64] sm:$0xf]
        %v231 = vld [vmem:[%s1 + $0x68] sm:$0xf]
        %v232 = vld [vmem:[%s1 + $0x6c] sm:$0xf]
        %v233 = vld [vmem:[%s1 + $0x70] sm:$0xf]
        %v234 = vld [vmem:[%s1 + $0x74] sm:$0xf]
        %v235 = vld [vmem:[%s1 + $0x78] sm:$0xf]
        %v236 = vld [vmem:[%s1 + $0x7c] sm:$0xf]
        %v237 = vld [vmem:[%s1 + $0x80] sm:$0xf]
        %v238 = vld [vmem:[%s1 + $0x84] sm:$0xf]
        %v239 = vld [vmem:[%s1 + $0x88] sm:$0xf]
        %v240 = vld [vmem:[%s1 + $0x8c] sm:$0xf]
        %v241 = vld [vmem:[%s1 + $0x90] sm:$0xf]
        %v242 = vld [vmem:[%s1 + $0x94] sm:$0xf]
        %v243 = vld [vmem:[%s1 + $0x98] sm:$0xf]
        %v244 = vld [vmem:[%s1 + $0x9c] sm:$0xf]
        %v245 = vld [vmem:[%s1 + $0xa0] sm:$0xf]
        %v246 = vld [vmem:[%s1 + $0xa4] sm:$0xf]
        %v247 = vld [vmem:[%s1 + $0xa8] sm:$0xf]
        %v248 = vld [vmem:[%s1 + $0xac] sm:$0xf]
        %v249 = vld [vmem:[%s1 + $0xb0] sm:$0xf]
        %v250 = vld [vmem:[%s1 + $0xb4] sm:$0xf]
        %v251 = vld [vmem:[%s1 + $0xb8] sm:$0xf]
        %v252 = vld [vmem:[%s1 + $0xbc] sm:$0xf]
        %v253 = vld [vmem:[%s1 + $0xc0] sm:$0xf]
        %v254 = vld [vmem:[%s1 + $0xc4] sm:$0xf]
        %v255 = vld [vmem:[%s1 + $0xc8] sm:$0xf]
        %v256 = vld [vmem:[%s1 + $0xcc] sm:$0xf]
        %v257 = vld [vmem:[%s1 + $0xd0] sm:$0xf]
        %v258 = vld [vmem:[%s1 + $0xd4] sm:$0xf]
        %v259 = vld [vmem:[%s1 + $0xd8] sm:$0xf]
        %v260 = vld [vmem:[%s1 + $0xdc] sm:$0xf]
        %v261 = vld [vmem:[%s1 + $0xe0] sm:$0xf]
        %v262 = vld [vmem:[%s1 + $0xe4] sm:$0xf]
        %v263 = vld [vmem:[%s1 + $0xe8] sm:$0xf]
        %v264 = vld [vmem:[%s1 + $0xec] sm:$0xf]
        %v265 = vld [vmem:[%s1 + $0xf0] sm:$0xf]
        %v266 = vld [vmem:[%s1 + $0xf4] sm:$0xf]
        %v267 = vld [vmem:[%s1 + $0xf8] sm:$0xf]
        %v268 = vld [vmem:[%s1 + $0xfc] sm:$0xf]
        %v269 = vld [vmem:[%s2] sm:$0x1]
        %v271 = vlaneseq
        %v272 = vshrl.u32 %v271, 7
        %v273 = vsub.s32 0, %v272
        %v274 = vrot.slane %v269, %v273
        %v280 = vunpack.c.l.b16 %v201
        %v281 = vunpack.c.h.b16 %v201
        %v282 = vunpack.c.l.b16 %v202
        %v283 = vunpack.c.h.b16 %v202
        %v284 = vunpack.c.l.b16 %v203
        %v285 = vunpack.c.h.b16 %v203
        %v286 = vunpack.c.l.b16 %v204
        %v287 = vunpack.c.h.b16 %v204
        %v288 = vpack.c.b16 %v284, %v280
        %v289 = vpack.c.b16 %v285, %v281
        %v290 = vpack.c.b16 %v286, %v282
        %v291 = vpack.c.b16 %v287, %v283
        %v360 = vunpack.c.l.b16 %v205
        %v361 = vunpack.c.l.b16 %v206
        %v362 = vunpack.c.l.b16 %v207
        %v363 = vunpack.c.l.b16 %v208
        %v364 = vunpack.c.l.b16 %v209
        %v365 = vunpack.c.l.b16 %v210
        %v366 = vunpack.c.l.b16 %v211
        %v367 = vunpack.c.l.b16 %v212
        %v368 = vunpack.c.l.b16 %v213
        %v369 = vunpack.c.l.b16 %v214
        %v370 = vunpack.c.l.b16 %v215
        %v371 = vunpack.c.l.b16 %v216
        %v372 = vunpack.c.l.b16 %v217
        %v373 = vunpack.c.l.b16 %v218
        %v374 = vunpack.c.l.b16 %v219
        %v375 = vunpack.c.l.b16 %v220
        %v376 = vunpack.c.l.b16 %v221
        %v377 = vunpack.c.l.b16 %v222
        %v378 = vunpack.c.l.b16 %v223
        %v379 = vunpack.c.l.b16 %v224
        %v380 = vunpack.c.l.b16 %v225
        %v381 = vunpack.c.l.b16 %v226
        %v382 = vunpack.c.l.b16 %v227
        %v383 = vunpack.c.l.b16 %v228
        %v384 = vunpack.c.l.b16 %v229
        %v385 = vunpack.c.l.b16 %v230
        %v386 = vunpack.c.l.b16 %v231
        %v387 = vunpack.c.l.b16 %v232
        %v388 = vunpack.c.l.b16 %v233
        %v389 = vunpack.c.l.b16 %v234
        %v390 = vunpack.c.l.b16 %v235
        %v391 = vunpack.c.l.b16 %v236
        %v392 = vunpack.c.l.b16 %v237
        %v393 = vunpack.c.l.b16 %v238
        %v394 = vunpack.c.l.b16 %v239
        %v395 = vunpack.c.l.b16 %v240
        %v396 = vunpack.c.l.b16 %v241
        %v397 = vunpack.c.l.b16 %v242
        %v398 = vunpack.c.l.b16 %v243
        %v399 = vunpack.c.l.b16 %v244
        %v400 = vunpack.c.l.b16 %v245
        %v401 = vunpack.c.l.b16 %v246
        %v402 = vunpack.c.l.b16 %v247
        %v403 = vunpack.c.l.b16 %v248
        %v404 = vunpack.c.l.b16 %v249
        %v405 = vunpack.c.l.b16 %v250
        %v406 = vunpack.c.l.b16 %v251
        %v407 = vunpack.c.l.b16 %v252
        %v408 = vunpack.c.l.b16 %v253
        %v409 = vunpack.c.l.b16 %v254
        %v410 = vunpack.c.l.b16 %v255
        %v411 = vunpack.c.l.b16 %v256
        %v412 = vunpack.c.l.b16 %v257
        %v413 = vunpack.c.l.b16 %v258
        %v414 = vunpack.c.l.b16 %v259
        %v415 = vunpack.c.l.b16 %v260
        %v416 = vunpack.c.l.b16 %v261
        %v417 = vunpack.c.l.b16 %v262
        %v418 = vunpack.c.l.b16 %v263
        %v419 = vunpack.c.l.b16 %v264
        %v420 = vunpack.c.l.b16 %v265
        %v421 = vunpack.c.l.b16 %v266
        %v422 = vunpack.c.l.b16 %v267
        %v423 = vunpack.c.l.b16 %v268
        %v424 = vpack.c.b16 %v361, %v360
        %v425 = vpack.c.b16 %v363, %v362
        %v426 = vpack.c.b16 %v365, %v364
        %v427 = vpack.c.b16 %v367, %v366
        %v428 = vpack.c.b16 %v369, %v368
        %v429 = vpack.c.b16 %v371, %v370
        %v430 = vpack.c.b16 %v373, %v372
        %v431 = vpack.c.b16 %v375, %v374
        %v432 = vpack.c.b16 %v377, %v376
        %v433 = vpack.c.b16 %v379, %v378
        %v434 = vpack.c.b16 %v381, %v380
        %v435 = vpack.c.b16 %v383, %v382
        %v436 = vpack.c.b16 %v385, %v384
        %v437 = vpack.c.b16 %v387, %v386
        %v438 = vpack.c.b16 %v389, %v388
        %v439 = vpack.c.b16 %v391, %v390
        %v440 = vpack.c.b16 %v393, %v392
        %v441 = vpack.c.b16 %v395, %v394
        %v442 = vpack.c.b16 %v397, %v396
        %v443 = vpack.c.b16 %v399, %v398
        %v444 = vpack.c.b16 %v401, %v400
        %v445 = vpack.c.b16 %v403, %v402
        %v446 = vpack.c.b16 %v405, %v404
        %v447 = vpack.c.b16 %v407, %v406
        %v448 = vpack.c.b16 %v409, %v408
        %v449 = vpack.c.b16 %v411, %v410
        %v450 = vpack.c.b16 %v413, %v412
        %v451 = vpack.c.b16 %v415, %v414
        %v452 = vpack.c.b16 %v417, %v416
        %v453 = vpack.c.b16 %v419, %v418
        %v454 = vpack.c.b16 %v421, %v420
        %v455 = vpack.c.b16 %v423, %v422
        %488 = vmatprep.subr.bf16.mxu0 0
        %489 = vmatpush1.bf16.msra.mxu0 %v431
        %490 = vmatprep.subr.bf16.mxu0 0
        %491 = vmatpush1.bf16.msra.mxu0 %v430
        %492 = vmatprep.subr.bf16.mxu0 0
        %493 = vmatpush1.bf16.msra.mxu0 %v429
        %494 = vmatprep.subr.bf16.mxu0 0
        %495 = vmatpush1.bf16.msra.mxu0 %v428
        %496 = vmatprep.subr.bf16.mxu0 0
        %497 = vmatpush1.bf16.msra.mxu0 %v427
        %498 = vmatprep.subr.bf16.mxu0 0
        %499 = vmatpush1.bf16.msra.mxu0 %v426
        %500 = vmatprep.subr.bf16.mxu0 0
        %501 = vmatpush1.bf16.msra.mxu0 %v425
        %502 = vmatprep.subr.bf16.mxu0 0
        %503 = vmatpush1.bf16.msra.mxu0 %v424
        %504 = vmatprep.subr.bf16.mxu0 0
        %505 = vmatpush2.bf16.msra.mxu0 %v439
        %506 = vmatprep.subr.bf16.mxu0 0
        %507 = vmatpush2.bf16.msra.mxu0 %v438
        %508 = vmatprep.subr.bf16.mxu0 0
        %509 = vmatpush2.bf16.msra.mxu0 %v437
        %510 = vmatprep.subr.bf16.mxu0 0
        %511 = vmatpush2.bf16.msra.mxu0 %v436
        %512 = vmatprep.subr.bf16.mxu0 0
        %513 = vmatpush2.bf16.msra.mxu0 %v435
        %514 = vmatprep.subr.bf16.mxu0 0
        %515 = vmatpush2.bf16.msra.mxu0 %v434
        %516 = vmatprep.subr.bf16.mxu0 0
        %517 = vmatpush2.bf16.msra.mxu0 %v433
        %518 = vmatprep.subr.bf16.mxu0 0
        %519 = vmatpush2.bf16.msra.mxu0 %v432
        %520 = vmatprep.mubr.bf16.mxu0 %v289
        %521 = vmatmul.mubr.bf16.gmra.mxu0 %v288
        %v522 = vpop.f32.mrf.mxu0
        %v523 = vadd.f32 %v274, %v522
        %v524 = vpop.f32.mrf.mxu0
        %v525 = vpop.f32.mrf.mxu0
        %v526 = vadd.f32 %v274, %v525
        %v527 = vpop.f32.mrf.mxu0
        %528 = vdwg.mxu0
        %529 = vmatprep.subr.bf16.mxu0 0
        %530 = vmatpush1.bf16.msra.mxu0 %v447
        %531 = vmatprep.subr.bf16.mxu0 0
        %532 = vmatpush1.bf16.msra.mxu0 %v446
        %533 = vmatprep.subr.bf16.mxu0 0
        %534 = vmatpush1.bf16.msra.mxu0 %v445
        %535 = vmatprep.subr.bf16.mxu0 0
        %536 = vmatpush1.bf16.msra.mxu0 %v444
        %537 = vmatprep.subr.bf16.mxu0 0
        %538 = vmatpush1.bf16.msra.mxu0 %v443
        %539 = vmatprep.subr.bf16.mxu0 0
        %540 = vmatpush1.bf16.msra.mxu0 %v442
        %541 = vmatprep.subr.bf16.mxu0 0
        %542 = vmatpush1.bf16.msra.mxu0 %v441
        %543 = vmatprep.subr.bf16.mxu0 0
        %544 = vmatpush1.bf16.msra.mxu0 %v440
        %545 = vmatprep.subr.bf16.mxu0 0
        %546 = vmatpush2.bf16.msra.mxu0 %v455
        %547 = vmatprep.subr.bf16.mxu0 0
        %548 = vmatpush2.bf16.msra.mxu0 %v454
        %549 = vmatprep.subr.bf16.mxu0 0
        %550 = vmatpush2.bf16.msra.mxu0 %v453
        %551 = vmatprep.subr.bf16.mxu0 0
        %552 = vmatpush2.bf16.msra.mxu0 %v452
        %553 = vmatprep.subr.bf16.mxu0 0
        %554 = vmatpush2.bf16.msra.mxu0 %v451
        %555 = vmatprep.subr.bf16.mxu0 0
        %556 = vmatpush2.bf16.msra.mxu0 %v450
        %557 = vmatprep.subr.bf16.mxu0 0
        %558 = vmatpush2.bf16.msra.mxu0 %v449
        %559 = vmatprep.subr.bf16.mxu0 0
        %560 = vmatpush2.bf16.msra.mxu0 %v448
        %561 = vmatprep.mubr.bf16.mxu0 %v291
        %562 = vmatmul.mubr.bf16.gmra.mxu0 %v290
        %v563 = vpop.f32.mrf.mxu0
        %v564 = vadd.f32 %v523, %v563
        %v565 = vpop.f32.mrf.mxu0
        %v566 = vpop.f32.mrf.mxu0
        %v567 = vadd.f32 %v526, %v566
        %v568 = vpop.f32.mrf.mxu0
        %569 = vdwg.mxu0
        %v570 = vmax.f32 %v564, 0.0
        %v571 = vmax.f32 %v567, 0.0
        %v572 = vpack.c.bf16 %v571, %v570
        %v574 = vunpack.c.l.b16 %v572
        %v575 = vunpack.c.h.b16 %v572
        %v576 = vpack.c.b16 %v574, %v574
        %v577 = vpack.c.b16 %v575, %v575
        %580 = vst [vmem:[%s177] sm:$0xf] %v576
        %581 = vst [vmem:[%s177 + $0x4] sm:$0xf] %v577
        %s582 = sand.u32 %s90, 1
        %s583 = sand.u32 %s90, 1
        %s584 = smul.addr %s583, 8
        %s585 = scalar_lea.vmem [#allocation2], %s584
        // Predicated region
        $region33: #{cnn_dqn_forward.5} parent=31 // pred_check
          %p586 = pneg %p100
        $region34: #{cnn_dqn_forward.5} parent=31 // pred_check_branch
          %588 = sbr.rel (%p586) target = $region36
        $region35: #{cnn_dqn_forward.5} parent=31 // pred_region
          %s589 = smul.u32 2, %s14
          %s590 = ssub.s32 3, %s589
          %p591 = scmp.lt.s32.totalorder %s590, 2
          %s592 = scalar_select %p591, %s590, 2
          %s593 = smul.u32 64, %s592
          %p594 = scmp.ne.s32.totalorder 0, %s593
          %s595 = smul.addr %s589, 4
          %s596 = scalar_lea.vmem %s3, %s595
          // Predicated region
          $region37: #{cnn_dqn_forward.5} parent=35 // pred_check
            %p597 = pneg %p594
          $region38: #{cnn_dqn_forward.5} parent=35 // pred_check_branch
            %599 = sbr.rel (%p597) target = $region40
          $region39: #{cnn_dqn_forward.5} parent=35 // pred_region
            // Predicated region
            $region41: #{cnn_dqn_forward.5} parent=39 // pred_check
              _
            $region42: #{cnn_dqn_forward.5} parent=39 // pred_check_branch
              %601 = sbr.rel target = $region44
            $region43: #{cnn_dqn_forward.5} parent=39 // pred_region
              // Predicated region
              $region63: #{cnn_dqn_forward.5} parent=43 // pred_check
                _
              $region64: #{cnn_dqn_forward.5} parent=43 // pred_check_branch
                %653 = sbr.rel (0) target = $region66
              $region65: #{cnn_dqn_forward.5} parent=43 // pred_region
                %s655 = ssub.s32 16, 1
                %s656 = sshrl.u32 %s592, 1
                // While loop
                $region67: #{cnn_dqn_forward.5} parent=65 // loop_pre_header
                  _
                $region68: #{cnn_dqn_forward.5} parent=65 // loop_header
                  %s658 = sphi 0, %s660
                  %p659 = scmp.ge.s32.totalorder %s658, %s656
                  %s663 = sphi 0, %s672
                  %s664 = sphi %s585, %s675
                  %s665 = sphi %s596, %s676
                $region69: #{cnn_dqn_forward.5} parent=65 // loop_header_branch
                  %662 = sbr.rel (%p659) target = $region73
                $region70: #{cnn_dqn_forward.5} parent=65 // loop_body
                  %v666 = vld [vmem:[%s664] sm:%s655]
                  %667 = vst [vmem:[%s665] sm:%s655] %v666
                  %v668 = vld [vmem:[%s664 + $0x4] sm:%s655]
                  %669 = vst [vmem:[%s665 + $0x4] sm:%s655] %v668
                  %s670 = sadd.s32 1, %s663
                  %p671 = scmp.ge.s32.totalorder %s670, %s656
                  %s672 = scalar_select %p671, 0, %s670
                  %s673 = smul.u32 %s672, 8
                  %s674 = smul.u32 %s672, 8
                  %s675 = scalar_lea.vmem %s585, %s673 [#allocation2]
                  %s676 = scalar_lea.vmem %s596, %s674
                $region71: #{cnn_dqn_forward.5} parent=65 // loop_footer
                  %s660 = sadd.s32 %s658, 1
                $region72: #{cnn_dqn_forward.5} parent=65 // loop_footer_branch
                  %657 = sbr.rel target = $region68
                $region73: #{cnn_dqn_forward.5} parent=65 // loop_exit
                  _
                %s677 = sshrl.u32 %s592, 1
                %s678 = sand.u32 %s592, 1
                %s679 = smul.u32 %s677, 2
                %s680 = smul.u32 4, %s679
                %s681 = scalar_lea.vmem %s585, %s680 [#allocation2]
                %s682 = smul.u32 4, %s679
                %s683 = scalar_lea.vmem %s596, %s682
                // While loop
                $region74: #{cnn_dqn_forward.5} parent=65 // loop_pre_header
                  _
                $region75: #{cnn_dqn_forward.5} parent=65 // loop_header
                  %s685 = sphi 0, %s687
                  %p686 = scmp.ge.s32.totalorder %s685, %s678
                  %s690 = sphi 0, %s697
                  %s691 = sphi %s681, %s700
                  %s692 = sphi %s683, %s701
                $region76: #{cnn_dqn_forward.5} parent=65 // loop_header_branch
                  %689 = sbr.rel (%p686) target = $region80
                $region77: #{cnn_dqn_forward.5} parent=65 // loop_body
                  %v693 = vld [vmem:[%s691] sm:%s655]
                  %694 = vst [vmem:[%s692] sm:%s655] %v693
                  %s695 = sadd.s32 1, %s690
                  %p696 = scmp.ge.s32.totalorder %s695, %s678
                  %s697 = scalar_select %p696, 0, %s695
                  %s698 = smul.u32 %s697, 4
                  %s699 = smul.u32 %s697, 4
                  %s700 = scalar_lea.vmem %s681, %s698 [#allocation2]
                  %s701 = scalar_lea.vmem %s683, %s699
                $region78: #{cnn_dqn_forward.5} parent=65 // loop_footer
                  %s687 = sadd.s32 %s685, 1
                $region79: #{cnn_dqn_forward.5} parent=65 // loop_footer_branch
                  %684 = sbr.rel target = $region75
                $region80: #{cnn_dqn_forward.5} parent=65 // loop_exit
                  _
              $region66: #{cnn_dqn_forward.5} parent=43 // pred_fallthru
                _
            $region44: #{cnn_dqn_forward.5} parent=39 // pred_fallthru
              _
            // Predicated region
            $region45: #{cnn_dqn_forward.5} parent=39 // pred_check
              _
            $region46: #{cnn_dqn_forward.5} parent=39 // pred_check_branch
              %603 = sbr.rel (0) target = $region48
            $region47: #{cnn_dqn_forward.5} parent=39 // pred_region
              %s605 = ssub.s32 16, 1
              %s606 = sshrl.u32 %s592, 1
              // While loop
              $region49: #{cnn_dqn_forward.5} parent=47 // loop_pre_header
                _
              $region50: #{cnn_dqn_forward.5} parent=47 // loop_header
                %s608 = sphi 0, %s610
                %p609 = scmp.ge.s32.totalorder %s608, %s606
                %s613 = sphi 0, %s622
                %s614 = sphi %s585, %s625
                %s615 = sphi %s596, %s626
              $region51: #{cnn_dqn_forward.5} parent=47 // loop_header_branch
                %612 = sbr.rel (%p609) target = $region55
              $region52: #{cnn_dqn_forward.5} parent=47 // loop_body
                %v616 = vld [vmem:[%s614] sm:%s605]
                %617 = vst [vmem:[%s615] sm:%s605] %v616
                %v618 = vld [vmem:[%s614 + $0x4] sm:%s605]
                %619 = vst [vmem:[%s615 + $0x4] sm:%s605] %v618
                %s620 = sadd.s32 1, %s613
                %p621 = scmp.ge.s32.totalorder %s620, %s606
                %s622 = scalar_select %p621, 0, %s620
                %s623 = smul.u32 %s622, 8
                %s624 = smul.u32 %s622, 8
                %s625 = scalar_lea.vmem %s585, %s623 [#allocation2]
                %s626 = scalar_lea.vmem %s596, %s624
              $region53: #{cnn_dqn_forward.5} parent=47 // loop_footer
                %s610 = sadd.s32 %s608, 1
              $region54: #{cnn_dqn_forward.5} parent=47 // loop_footer_branch
                %607 = sbr.rel target = $region50
              $region55: #{cnn_dqn_forward.5} parent=47 // loop_exit
                _
              %s627 = sshrl.u32 %s592, 1
              %s628 = sand.u32 %s592, 1
              %s629 = smul.u32 %s627, 2
              %s630 = smul.u32 4, %s629
              %s631 = scalar_lea.vmem %s585, %s630 [#allocation2]
              %s632 = smul.u32 4, %s629
              %s633 = scalar_lea.vmem %s596, %s632
              // While loop
              $region56: #{cnn_dqn_forward.5} parent=47 // loop_pre_header
                _
              $region57: #{cnn_dqn_forward.5} parent=47 // loop_header
                %s635 = sphi 0, %s637
                %p636 = scmp.ge.s32.totalorder %s635, %s628
                %s640 = sphi 0, %s647
                %s641 = sphi %s631, %s650
                %s642 = sphi %s633, %s651
              $region58: #{cnn_dqn_forward.5} parent=47 // loop_header_branch
                %639 = sbr.rel (%p636) target = $region62
              $region59: #{cnn_dqn_forward.5} parent=47 // loop_body
                %v643 = vld [vmem:[%s641] sm:%s605]
                %644 = vst [vmem:[%s642] sm:%s605] %v643
                %s645 = sadd.s32 1, %s640
                %p646 = scmp.ge.s32.totalorder %s645, %s628
                %s647 = scalar_select %p646, 0, %s645
                %s648 = smul.u32 %s647, 4
                %s649 = smul.u32 %s647, 4
                %s650 = scalar_lea.vmem %s631, %s648 [#allocation2]
                %s651 = scalar_lea.vmem %s633, %s649
              $region60: #{cnn_dqn_forward.5} parent=47 // loop_footer
                %s637 = sadd.s32 %s635, 1
              $region61: #{cnn_dqn_forward.5} parent=47 // loop_footer_branch
                %634 = sbr.rel target = $region57
              $region62: #{cnn_dqn_forward.5} parent=47 // loop_exit
                _
            $region48: #{cnn_dqn_forward.5} parent=39 // pred_fallthru
              _
          $region40: #{cnn_dqn_forward.5} parent=35 // pred_fallthru
            _
          %702 = vnop
        $region36: #{cnn_dqn_forward.5} parent=31 // pred_fallthru
          _
      $region32: #{cnn_dqn_forward.5} parent=5 // pred_fallthru
        _
      %p703 = scmp.le.s32.totalorder 2, %s9
      // Predicated region
      $region81: #{cnn_dqn_forward.5} parent=5 // pred_check
        %p704 = pneg %p703
      $region82: #{cnn_dqn_forward.5} parent=5 // pred_check_branch
        %706 = sbr.rel (%p704) target = $region84
      $region83: #{cnn_dqn_forward.5} parent=5 // pred_region
        %s707 = ssub.s32 %s9, 2
        // Predicated region
        $region85: #{cnn_dqn_forward.5} parent=83 // pred_check
          %p708 = pneg %p106
        $region86: #{cnn_dqn_forward.5} parent=83 // pred_check_branch
          %710 = sbr.rel (%p708) target = $region88
        $region87: #{cnn_dqn_forward.5} parent=83 // pred_region
          %s711 = sand.u32 %s91, 1
          %s712 = sand.u32 %s91, 1
          %s713 = smul.addr %s712, 8
          %s714 = scalar_lea.vmem [#allocation2], %s713
        $region88: #{cnn_dqn_forward.5} parent=83 // pred_fallthru
          _
      $region84: #{cnn_dqn_forward.5} parent=5 // pred_fallthru
        _
    $region6: #{cnn_dqn_forward.5} parent=1 // loop_footer
      %s13 = sadd.s32 1, %s9
    $region7: #{cnn_dqn_forward.5} parent=1 // loop_footer_branch
      %8 = sbr.rel target = $region3
    $region8: #{cnn_dqn_forward.5} parent=1 // loop_exit
      _

// kernel: cnn_dqn_forward.6
$region0: #{cnn_dqn_forward.6}
  #allocation0 [shape = 'u32[]', space=smem, size = 0x4, offset = 0x4, fixed_abs, tag = 'smem constant byte address 0x4 - core index']
  #allocation1 [shape = 'u32[144,128]{1,0:T(1,128)}', space=vmem, size = 0x12000, scoped, tag = 'internal scratch']
  %s0 = inlined_call_operand.vmem [shape: bf16[2,640], index: 0, kind: input, shape index: {}]
  %s1 = inlined_call_operand.vmem [shape: bf16[640,128], index: 1, kind: input, shape index: {}]
  %s2 = inlined_call_operand.vmem [shape: f32[1,128], index: 2, kind: input, shape index: {}]
  %s3 = inlined_call_operand.vmem [shape: bf16[2,128], index: 3, kind: output, shape index: {}]
  %s4 = sld [smem:[#allocation0]]
  $region22: #{cnn_dqn_forward.6} parent=0
    _
  %s6 = ssub.s32 1, %s4
  %s7 = scalar_select 0, %s6, %s4
  // Predicated region
  $region2: #{cnn_dqn_forward.6} parent=0 // pred_check
    _
  $region3: #{cnn_dqn_forward.6} parent=0 // pred_check_branch
    %9 = sbr.rel (0) target = $region5
  $region4: #{cnn_dqn_forward.6} parent=0 // pred_region
    _
  $region5: #{cnn_dqn_forward.6} parent=0 // pred_fallthru
    _
  // Predicated region
  $region6: #{cnn_dqn_forward.6} parent=0 // pred_check
    _
  $region7: #{cnn_dqn_forward.6} parent=0 // pred_check_branch
    %11 = sbr.rel (0) target = $region9
  $region8: #{cnn_dqn_forward.6} parent=0 // pred_region
    _
  $region9: #{cnn_dqn_forward.6} parent=0 // pred_fallthru
    _
  // Predicated region
  $region10: #{cnn_dqn_forward.6} parent=0 // pred_check
    _
  $region11: #{cnn_dqn_forward.6} parent=0 // pred_check_branch
    %13 = sbr.rel (0) target = $region13
  $region12: #{cnn_dqn_forward.6} parent=0 // pred_region
    _
  $region13: #{cnn_dqn_forward.6} parent=0 // pred_fallthru
    _
  %v15 = vld [vmem:[%s0] sm:$0x1f]
  %v16 = vld [vmem:[%s1] sm:$0xf]
  %v17 = vld [vmem:[%s1 + $0x4] sm:$0xf]
  %v18 = vld [vmem:[%s1 + $0x8] sm:$0xf]
  %v19 = vld [vmem:[%s1 + $0xc] sm:$0xf]
  %v20 = vld [vmem:[%s1 + $0x10] sm:$0xf]
  %v21 = vld [vmem:[%s1 + $0x14] sm:$0xf]
  %v22 = vld [vmem:[%s1 + $0x18] sm:$0xf]
  %v23 = vld [vmem:[%s1 + $0x1c] sm:$0xf]
  %v24 = vld [vmem:[%s1 + $0x20] sm:$0xf]
  %v25 = vld [vmem:[%s1 + $0x24] sm:$0xf]
  %v26 = vld [vmem:[%s1 + $0x28] sm:$0xf]
  %v27 = vld [vmem:[%s1 + $0x2c] sm:$0xf]
  %v28 = vld [vmem:[%s1 + $0x30] sm:$0xf]
  %v29 = vld [vmem:[%s1 + $0x34] sm:$0xf]
  %v30 = vld [vmem:[%s1 + $0x38] sm:$0xf]
  %v31 = vld [vmem:[%s1 + $0x3c] sm:$0xf]
  %v32 = vld [vmem:[%s1 + $0x40] sm:$0xf]
  %v33 = vld [vmem:[%s1 + $0x44] sm:$0xf]
  %v34 = vld [vmem:[%s1 + $0x48] sm:$0xf]
  %v35 = vld [vmem:[%s1 + $0x4c] sm:$0xf]
  %v36 = vld [vmem:[%s1 + $0x50] sm:$0xf]
  %v37 = vld [vmem:[%s1 + $0x54] sm:$0xf]
  %v38 = vld [vmem:[%s1 + $0x58] sm:$0xf]
  %v39 = vld [vmem:[%s1 + $0x5c] sm:$0xf]
  %v40 = vld [vmem:[%s1 + $0x60] sm:$0xf]
  %v41 = vld [vmem:[%s1 + $0x64] sm:$0xf]
  %v42 = vld [vmem:[%s1 + $0x68] sm:$0xf]
  %v43 = vld [vmem:[%s1 + $0x6c] sm:$0xf]
  %v44 = vld [vmem:[%s1 + $0x70] sm:$0xf]
  %v45 = vld [vmem:[%s1 + $0x74] sm:$0xf]
  %v46 = vld [vmem:[%s1 + $0x78] sm:$0xf]
  %v47 = vld [vmem:[%s1 + $0x7c] sm:$0xf]
  %v48 = vld [vmem:[%s1 + $0x80] sm:$0xf]
  %v49 = vld [vmem:[%s1 + $0x84] sm:$0xf]
  %v50 = vld [vmem:[%s1 + $0x88] sm:$0xf]
  %v51 = vld [vmem:[%s1 + $0x8c] sm:$0xf]
  %v52 = vld [vmem:[%s1 + $0x90] sm:$0xf]
  %v53 = vld [vmem:[%s1 + $0x94] sm:$0xf]
  %v54 = vld [vmem:[%s1 + $0x98] sm:$0xf]
  %v55 = vld [vmem:[%s1 + $0x9c] sm:$0xf]
  %v56 = vld [vmem:[%s1 + $0xa0] sm:$0xf]
  %v57 = vld [vmem:[%s1 + $0xa4] sm:$0xf]
  %v58 = vld [vmem:[%s1 + $0xa8] sm:$0xf]
  %v59 = vld [vmem:[%s1 + $0xac] sm:$0xf]
  %v60 = vld [vmem:[%s1 + $0xb0] sm:$0xf]
  %v61 = vld [vmem:[%s1 + $0xb4] sm:$0xf]
  %v62 = vld [vmem:[%s1 + $0xb8] sm:$0xf]
  %v63 = vld [vmem:[%s1 + $0xbc] sm:$0xf]
  %v64 = vld [vmem:[%s1 + $0xc0] sm:$0xf]
  %v65 = vld [vmem:[%s1 + $0xc4] sm:$0xf]
  %v66 = vld [vmem:[%s1 + $0xc8] sm:$0xf]
  %v67 = vld [vmem:[%s1 + $0xcc] sm:$0xf]
  %v68 = vld [vmem:[%s1 + $0xd0] sm:$0xf]
  %v69 = vld [vmem:[%s1 + $0xd4] sm:$0xf]
  %v70 = vld [vmem:[%s1 + $0xd8] sm:$0xf]
  %v71 = vld [vmem:[%s1 + $0xdc] sm:$0xf]
  %v72 = vld [vmem:[%s1 + $0xe0] sm:$0xf]
  %v73 = vld [vmem:[%s1 + $0xe4] sm:$0xf]
  %v74 = vld [vmem:[%s1 + $0xe8] sm:$0xf]
  %v75 = vld [vmem:[%s1 + $0xec] sm:$0xf]
  %v76 = vld [vmem:[%s1 + $0xf0] sm:$0xf]
  %v77 = vld [vmem:[%s1 + $0xf4] sm:$0xf]
  %v78 = vld [vmem:[%s1 + $0xf8] sm:$0xf]
  %v79 = vld [vmem:[%s1 + $0xfc] sm:$0xf]
  %v80 = vld [vmem:[%s1 + $0x100] sm:$0xf]
  %v81 = vld [vmem:[%s1 + $0x104] sm:$0xf]
  %v82 = vld [vmem:[%s1 + $0x108] sm:$0xf]
  %v83 = vld [vmem:[%s1 + $0x10c] sm:$0xf]
  %v84 = vld [vmem:[%s1 + $0x110] sm:$0xf]
  %v85 = vld [vmem:[%s1 + $0x114] sm:$0xf]
  %v86 = vld [vmem:[%s1 + $0x118] sm:$0xf]
  %v87 = vld [vmem:[%s1 + $0x11c] sm:$0xf]
  %v88 = vld [vmem:[%s1 + $0x120] sm:$0xf]
  %v89 = vld [vmem:[%s1 + $0x124] sm:$0xf]
  %v90 = vld [vmem:[%s1 + $0x128] sm:$0xf]
  %v91 = vld [vmem:[%s1 + $0x12c] sm:$0xf]
  %v92 = vld [vmem:[%s1 + $0x130] sm:$0xf]
  %v93 = vld [vmem:[%s1 + $0x134] sm:$0xf]
  %v94 = vld [vmem:[%s1 + $0x138] sm:$0xf]
  %v95 = vld [vmem:[%s1 + $0x13c] sm:$0xf]
  %v96 = vld [vmem:[%s2] sm:$0x1]
  %v98 = vlaneseq
  %v99 = vshrl.u32 %v98, 7
  %v100 = vsub.s32 0, %v99
  %v101 = vrot.slane %v96, %v100
  %v104 = vcombine.high %v15, %v15
  %v106 = vunpack.c.l.s4 1966171168
  %v107 = vunpack.c.0.s8 %v106
  %v108 = vlaneseq
  %v109 = vshrl.u32 %v108, 7
  %v110 = vsub.s32 %v107, %v109
  %v111 = vrot.slane %v15, %v110
  %v113 = vunpack.c.l.s4 1966171168
  %v114 = vunpack.c.0.s8 %v113
  %v115 = vlaneseq
  %v116 = vshrl.u32 %v115, 7
  %v117 = vsub.s32 %v114, %v116
  %v118 = vrot.slane %v104, %v117
  %v119 = vcombine.high %v111, %v111
  %v121 = vunpack.c.l.s4 1966171168
  %v122 = vunpack.c.0.s8 %v121
  %v123 = vlaneseq
  %v124 = vshrl.u32 %v123, 7
  %v125 = vsub.s32 %v122, %v124
  %v126 = vrot.slane %v111, %v125
  %v128 = vunpack.c.l.s4 1966171168
  %v129 = vunpack.c.0.s8 %v128
  %v130 = vlaneseq
  %v131 = vshrl.u32 %v130, 7
  %v132 = vsub.s32 %v129, %v131
  %v133 = vrot.slane %v118, %v132
  %v135 = vunpack.c.l.s4 1966171168
  %v136 = vunpack.c.0.s8 %v135
  %v137 = vlaneseq
  %v138 = vshrl.u32 %v137, 7
  %v139 = vsub.s32 %v136, %v138
  %v140 = vrot.slane %v119, %v139
  %v141 = vcombine.high %v126, %v126
  %v142 = vcombine.high %v140, %v140
  %v228 = vunpack.c.l.b16 %v16
  %v229 = vunpack.c.l.b16 %v17
  %v230 = vunpack.c.l.b16 %v18
  %v231 = vunpack.c.l.b16 %v19
  %v232 = vunpack.c.l.b16 %v20
  %v233 = vunpack.c.l.b16 %v21
  %v234 = vunpack.c.l.b16 %v22
  %v235 = vunpack.c.l.b16 %v23
  %v236 = vunpack.c.l.b16 %v24
  %v237 = vunpack.c.l.b16 %v25
  %v238 = vunpack.c.l.b16 %v26
  %v239 = vunpack.c.l.b16 %v27
  %v240 = vunpack.c.l.b16 %v28
  %v241 = vunpack.c.l.b16 %v29
  %v242 = vunpack.c.l.b16 %v30
  %v243 = vunpack.c.l.b16 %v31
  %v244 = vunpack.c.l.b16 %v32
  %v245 = vunpack.c.l.b16 %v33
  %v246 = vunpack.c.l.b16 %v34
  %v247 = vunpack.c.l.b16 %v35
  %v248 = vunpack.c.l.b16 %v36
  %v249 = vunpack.c.l.b16 %v37
  %v250 = vunpack.c.l.b16 %v38
  %v251 = vunpack.c.l.b16 %v39
  %v252 = vunpack.c.l.b16 %v40
  %v253 = vunpack.c.l.b16 %v41
  %v254 = vunpack.c.l.b16 %v42
  %v255 = vunpack.c.l.b16 %v43
  %v256 = vunpack.c.l.b16 %v44
  %v257 = vunpack.c.l.b16 %v45
  %v258 = vunpack.c.l.b16 %v46
  %v259 = vunpack.c.l.b16 %v47
  %v260 = vunpack.c.l.b16 %v48
  %v261 = vunpack.c.l.b16 %v49
  %v262 = vunpack.c.l.b16 %v50
  %v263 = vunpack.c.l.b16 %v51
  %v264 = vunpack.c.l.b16 %v52
  %v265 = vunpack.c.l.b16 %v53
  %v266 = vunpack.c.l.b16 %v54
  %v267 = vunpack.c.l.b16 %v55
  %v268 = vunpack.c.l.b16 %v56
  %v269 = vunpack.c.l.b16 %v57
  %v270 = vunpack.c.l.b16 %v58
  %v271 = vunpack.c.l.b16 %v59
  %v272 = vunpack.c.l.b16 %v60
  %v273 = vunpack.c.l.b16 %v61
  %v274 = vunpack.c.l.b16 %v62
  %v275 = vunpack.c.l.b16 %v63
  %v276 = vunpack.c.l.b16 %v64
  %v277 = vunpack.c.l.b16 %v65
  %v278 = vunpack.c.l.b16 %v66
  %v279 = vunpack.c.l.b16 %v67
  %v280 = vunpack.c.l.b16 %v68
  %v281 = vunpack.c.l.b16 %v69
  %v282 = vunpack.c.l.b16 %v70
  %v283 = vunpack.c.l.b16 %v71
  %v284 = vunpack.c.l.b16 %v72
  %v285 = vunpack.c.l.b16 %v73
  %v286 = vunpack.c.l.b16 %v74
  %v287 = vunpack.c.l.b16 %v75
  %v288 = vunpack.c.l.b16 %v76
  %v289 = vunpack.c.l.b16 %v77
  %v290 = vunpack.c.l.b16 %v78
  %v291 = vunpack.c.l.b16 %v79
  %v292 = vunpack.c.l.b16 %v80
  %v293 = vunpack.c.l.b16 %v81
  %v294 = vunpack.c.l.b16 %v82
  %v295 = vunpack.c.l.b16 %v83
  %v296 = vunpack.c.l.b16 %v84
  %v297 = vunpack.c.l.b16 %v85
  %v298 = vunpack.c.l.b16 %v86
  %v299 = vunpack.c.l.b16 %v87
  %v300 = vunpack.c.l.b16 %v88
  %v301 = vunpack.c.l.b16 %v89
  %v302 = vunpack.c.l.b16 %v90
  %v303 = vunpack.c.l.b16 %v91
  %v304 = vunpack.c.l.b16 %v92
  %v305 = vunpack.c.l.b16 %v93
  %v306 = vunpack.c.l.b16 %v94
  %v307 = vunpack.c.l.b16 %v95
  %v308 = vpack.c.b16 %v229, %v228
  %v309 = vpack.c.b16 %v231, %v230
  %v310 = vpack.c.b16 %v233, %v232
  %v311 = vpack.c.b16 %v235, %v234
  %v312 = vpack.c.b16 %v237, %v236
  %v313 = vpack.c.b16 %v239, %v238
  %v314 = vpack.c.b16 %v241, %v240
  %v315 = vpack.c.b16 %v243, %v242
  %v316 = vpack.c.b16 %v245, %v244
  %v317 = vpack.c.b16 %v247, %v246
  %v318 = vpack.c.b16 %v249, %v248
  %v319 = vpack.c.b16 %v251, %v250
  %v320 = vpack.c.b16 %v253, %v252
  %v321 = vpack.c.b16 %v255, %v254
  %v322 = vpack.c.b16 %v257, %v256
  %v323 = vpack.c.b16 %v259, %v258
  %v324 = vpack.c.b16 %v261, %v260
  %v325 = vpack.c.b16 %v263, %v262
  %v326 = vpack.c.b16 %v265, %v264
  %v327 = vpack.c.b16 %v267, %v266
  %v328 = vpack.c.b16 %v269, %v268
  %v329 = vpack.c.b16 %v271, %v270
  %v330 = vpack.c.b16 %v273, %v272
  %v331 = vpack.c.b16 %v275, %v274
  %v332 = vpack.c.b16 %v277, %v276
  %v333 = vpack.c.b16 %v279, %v278
  %v334 = vpack.c.b16 %v281, %v280
  %v335 = vpack.c.b16 %v283, %v282
  %v336 = vpack.c.b16 %v285, %v284
  %v337 = vpack.c.b16 %v287, %v286
  %v338 = vpack.c.b16 %v289, %v288
  %v339 = vpack.c.b16 %v291, %v290
  %v340 = vpack.c.b16 %v293, %v292
  %v341 = vpack.c.b16 %v295, %v294
  %v342 = vpack.c.b16 %v297, %v296
  %v343 = vpack.c.b16 %v299, %v298
  %v344 = vpack.c.b16 %v301, %v300
  %v345 = vpack.c.b16 %v303, %v302
  %v346 = vpack.c.b16 %v305, %v304
  %v347 = vpack.c.b16 %v307, %v306
  %388 = vmatprep.subr.bf16.mxu0 0
  %389 = vmatpush1.bf16.msra.mxu0 %v315
  %390 = vmatprep.subr.bf16.mxu0 0
  %391 = vmatpush1.bf16.msra.mxu0 %v314
  %392 = vmatprep.subr.bf16.mxu0 0
  %393 = vmatpush1.bf16.msra.mxu0 %v313
  %394 = vmatprep.subr.bf16.mxu0 0
  %395 = vmatpush1.bf16.msra.mxu0 %v312
  %396 = vmatprep.subr.bf16.mxu0 0
  %397 = vmatpush1.bf16.msra.mxu0 %v311
  %398 = vmatprep.subr.bf16.mxu0 0
  %399 = vmatpush1.bf16.msra.mxu0 %v310
  %400 = vmatprep.subr.bf16.mxu0 0
  %401 = vmatpush1.bf16.msra.mxu0 %v309
  %402 = vmatprep.subr.bf16.mxu0 0
  %403 = vmatpush1.bf16.msra.mxu0 %v308
  %404 = vmatprep.subr.bf16.mxu0 0
  %405 = vmatpush2.bf16.msra.mxu0 %v323
  %406 = vmatprep.subr.bf16.mxu0 0
  %407 = vmatpush2.bf16.msra.mxu0 %v322
  %408 = vmatprep.subr.bf16.mxu0 0
  %409 = vmatpush2.bf16.msra.mxu0 %v321
  %410 = vmatprep.subr.bf16.mxu0 0
  %411 = vmatpush2.bf16.msra.mxu0 %v320
  %412 = vmatprep.subr.bf16.mxu0 0
  %413 = vmatpush2.bf16.msra.mxu0 %v319
  %414 = vmatprep.subr.bf16.mxu0 0
  %415 = vmatpush2.bf16.msra.mxu0 %v318
  %416 = vmatprep.subr.bf16.mxu0 0
  %417 = vmatpush2.bf16.msra.mxu0 %v317
  %418 = vmatprep.subr.bf16.mxu0 0
  %419 = vmatpush2.bf16.msra.mxu0 %v316
  %420 = vmatprep.mubr.bf16.mxu0 %v140
  %421 = vmatmul.mubr.bf16.gmra.mxu0 %v126
  %v422 = vpop.f32.mrf.mxu0
  %v423 = vadd.f32 %v101, %v422
  %v424 = vpop.f32.mrf.mxu0
  %v425 = vpop.f32.mrf.mxu0
  %v426 = vpop.f32.mrf.mxu0
  %427 = vdwg.mxu0
  %428 = vmatprep.subr.bf16.mxu0 0
  %429 = vmatpush1.bf16.msra.mxu0 %v331
  %430 = vmatprep.subr.bf16.mxu0 0
  %431 = vmatpush1.bf16.msra.mxu0 %v330
  %432 = vmatprep.subr.bf16.mxu0 0
  %433 = vmatpush1.bf16.msra.mxu0 %v329
  %434 = vmatprep.subr.bf16.mxu0 0
  %435 = vmatpush1.bf16.msra.mxu0 %v328
  %436 = vmatprep.subr.bf16.mxu0 0
  %437 = vmatpush1.bf16.msra.mxu0 %v327
  %438 = vmatprep.subr.bf16.mxu0 0
  %439 = vmatpush1.bf16.msra.mxu0 %v326
  %440 = vmatprep.subr.bf16.mxu0 0
  %441 = vmatpush1.bf16.msra.mxu0 %v325
  %442 = vmatprep.subr.bf16.mxu0 0
  %443 = vmatpush1.bf16.msra.mxu0 %v324
  %444 = vmatprep.subr.bf16.mxu0 0
  %445 = vmatpush2.bf16.msra.mxu0 %v339
  %446 = vmatprep.subr.bf16.mxu0 0
  %447 = vmatpush2.bf16.msra.mxu0 %v338
  %448 = vmatprep.subr.bf16.mxu0 0
  %449 = vmatpush2.bf16.msra.mxu0 %v337
  %450 = vmatprep.subr.bf16.mxu0 0
  %451 = vmatpush2.bf16.msra.mxu0 %v336
  %452 = vmatprep.subr.bf16.mxu0 0
  %453 = vmatpush2.bf16.msra.mxu0 %v335
  %454 = vmatprep.subr.bf16.mxu0 0
  %455 = vmatpush2.bf16.msra.mxu0 %v334
  %456 = vmatprep.subr.bf16.mxu0 0
  %457 = vmatpush2.bf16.msra.mxu0 %v333
  %458 = vmatprep.subr.bf16.mxu0 0
  %459 = vmatpush2.bf16.msra.mxu0 %v332
  %460 = vmatprep.mubr.bf16.mxu0 %v142
  %461 = vmatmul.mubr.bf16.gmra.mxu0 %v141
  %v462 = vpop.f32.mrf.mxu0
  %v463 = vadd.f32 %v423, %v462
  %v464 = vpop.f32.mrf.mxu0
  %v465 = vpop.f32.mrf.mxu0
  %v466 = vpop.f32.mrf.mxu0
  %467 = vdwg.mxu0
  %468 = vmatprep.subr.bf16.mxu0 0
  %469 = vmatpush1.bf16.msra.mxu0 %v347
  %470 = vmatprep.subr.bf16.mxu0 0
  %471 = vmatpush1.bf16.msra.mxu0 %v346
  %472 = vmatprep.subr.bf16.mxu0 0
  %473 = vmatpush1.bf16.msra.mxu0 %v345
  %474 = vmatprep.subr.bf16.mxu0 0
  %475 = vmatpush1.bf16.msra.mxu0 %v344
  %476 = vmatprep.subr.bf16.mxu0 0
  %477 = vmatpush1.bf16.msra.mxu0 %v343
  %478 = vmatprep.subr.bf16.mxu0 0
  %479 = vmatpush1.bf16.msra.mxu0 %v342
  %480 = vmatprep.subr.bf16.mxu0 0
  %481 = vmatpush1.bf16.msra.mxu0 %v341
  %482 = vmatprep.subr.bf16.mxu0 0
  %483 = vmatpush1.bf16.msra.mxu0 %v340
  %484 = vmatprep.subr.bf16.mxu0 0
  %485 = vmatpush2.bf16.msra.mxu0 0
  %486 = vmatprep.subr.bf16.mxu0 0
  %487 = vmatpush2.bf16.msra.mxu0 0
  %488 = vmatprep.subr.bf16.mxu0 0
  %489 = vmatpush2.bf16.msra.mxu0 0
  %490 = vmatprep.subr.bf16.mxu0 0
  %491 = vmatpush2.bf16.msra.mxu0 0
  %492 = vmatprep.subr.bf16.mxu0 0
  %493 = vmatpush2.bf16.msra.mxu0 0
  %494 = vmatprep.subr.bf16.mxu0 0
  %495 = vmatpush2.bf16.msra.mxu0 0
  %496 = vmatprep.subr.bf16.mxu0 0
  %497 = vmatpush2.bf16.msra.mxu0 0
  %498 = vmatprep.subr.bf16.mxu0 0
  %499 = vmatpush2.bf16.msra.mxu0 0
  %500 = vmatprep.mubr.bf16.mxu0 0
  %501 = vmatmul.mubr.bf16.gmra.mxu0 %v133
  %v502 = vpop.f32.mrf.mxu0
  %v503 = vadd.f32 %v463, %v502
  %v504 = vpop.f32.mrf.mxu0
  %v505 = vpop.f32.mrf.mxu0
  %v506 = vpop.f32.mrf.mxu0
  %507 = vdwg.mxu0
  %v508 = vmax.f32 %v503, 0.0
  %v509 = vpack.c.bf16 %v508, %v508
  %510 = vst [vmem:[%s3] sm:$0x1] %v509
  // Predicated region
  $region14: #{cnn_dqn_forward.6} parent=0 // pred_check
    _
  $region15: #{cnn_dqn_forward.6} parent=0 // pred_check_branch
    %512 = sbr.rel (0) target = $region17
  $region16: #{cnn_dqn_forward.6} parent=0 // pred_region
    _
  $region17: #{cnn_dqn_forward.6} parent=0 // pred_fallthru
    _
  // Predicated region
  $region18: #{cnn_dqn_forward.6} parent=0 // pred_check
    _
  $region19: #{cnn_dqn_forward.6} parent=0 // pred_check_branch
    %514 = sbr.rel (0) target = $region21
  $region20: #{cnn_dqn_forward.6} parent=0 // pred_region
    _
  $region21: #{cnn_dqn_forward.6} parent=0 // pred_fallthru
    _

// kernel: cnn_dqn_forward.7
$region0: #{cnn_dqn_forward.7}
  #allocation0 [shape = 'u32[]', space=smem, size = 0x4, offset = 0x4, fixed_abs, tag = 'smem constant byte address 0x4 - core index']
  #allocation1 [shape = 'u32[144,128]{1,0:T(1,128)}', space=vmem, size = 0x12000, scoped, tag = 'internal scratch']
  %s0 = inlined_call_operand.vmem [shape: bf16[2,128], index: 0, kind: input, shape index: {}]
  %s1 = inlined_call_operand.vmem [shape: bf16[128,512], index: 1, kind: input, shape index: {}]
  %s2 = inlined_call_operand.vmem [shape: f32[1,512], index: 2, kind: input, shape index: {}]
  %s3 = inlined_call_operand.vmem [shape: bf16[512,128], index: 3, kind: input, shape index: {}]
  %s4 = inlined_call_operand.vmem [shape: f32[1,128], index: 4, kind: input, shape index: {}]
  %s5 = inlined_call_operand.hbm [shape: f32[2,128], index: 5, kind: output, shape index: {}]
  %s6 = sld [smem:[#allocation0]]
  $region30: #{cnn_dqn_forward.7} parent=0
    _
  %s8 = ssub.s32 1, %s6
  %s9 = scalar_select 0, %s8, %s6
  $region1: #{cnn_dqn_forward.7} parent=0
    #allocation2 [shape = 'u8[1024]{0}', space=vmem, size = 0x400, scoped, tag = 'output window, operand 0, single buffered']
    #allocation3 [shape = 's32[1]{0}', space=sflag, size = 0x4, scoped, tag = 'scoped memory for cnn_dqn_forward.7']
    %10 = vsyncpa [#allocation3], 0
    // Predicated region
    $region2: #{cnn_dqn_forward.7} parent=1 // pred_check
      _
    $region3: #{cnn_dqn_forward.7} parent=1 // pred_check_branch
      %12 = sbr.rel (0) target = $region5
    $region4: #{cnn_dqn_forward.7} parent=1 // pred_region
      _
    $region5: #{cnn_dqn_forward.7} parent=1 // pred_fallthru
      _
    // Predicated region
    $region6: #{cnn_dqn_forward.7} parent=1 // pred_check
      _
    $region7: #{cnn_dqn_forward.7} parent=1 // pred_check_branch
      %14 = sbr.rel (0) target = $region9
    $region8: #{cnn_dqn_forward.7} parent=1 // pred_region
      _
    $region9: #{cnn_dqn_forward.7} parent=1 // pred_fallthru
      _
    // Predicated region
    $region10: #{cnn_dqn_forward.7} parent=1 // pred_check
      _
    $region11: #{cnn_dqn_forward.7} parent=1 // pred_check_branch
      %16 = sbr.rel (0) target = $region13
    $region12: #{cnn_dqn_forward.7} parent=1 // pred_region
      _
    $region13: #{cnn_dqn_forward.7} parent=1 // pred_fallthru
      _
    // Predicated region
    $region14: #{cnn_dqn_forward.7} parent=1 // pred_check
      _
    $region15: #{cnn_dqn_forward.7} parent=1 // pred_check_branch
      %18 = sbr.rel (0) target = $region17
    $region16: #{cnn_dqn_forward.7} parent=1 // pred_region
      _
    $region17: #{cnn_dqn_forward.7} parent=1 // pred_fallthru
      _
    // Predicated region
    $region18: #{cnn_dqn_forward.7} parent=1 // pred_check
      _
    $region19: #{cnn_dqn_forward.7} parent=1 // pred_check_branch
      %20 = sbr.rel (0) target = $region21
    $region20: #{cnn_dqn_forward.7} parent=1 // pred_region
      _
    $region21: #{cnn_dqn_forward.7} parent=1 // pred_fallthru
      _
    %v22 = vld [vmem:[%s0] sm:$0x1]
    %v23 = vld [vmem:[%s1] sm:$0xff]
    %v24 = vld [vmem:[%s1 + $0x8] sm:$0xff]
    %v25 = vld [vmem:[%s1 + $0x10] sm:$0xff]
    %v26 = vld [vmem:[%s1 + $0x18] sm:$0xff]
    %v27 = vld [vmem:[%s1 + $0x20] sm:$0xff]
    %v28 = vld [vmem:[%s1 + $0x28] sm:$0xff]
    %v29 = vld [vmem:[%s1 + $0x30] sm:$0xff]
    %v30 = vld [vmem:[%s1 + $0x38] sm:$0xff]
    %v31 = vld [vmem:[%s1 + $0x40] sm:$0xff]
    %v32 = vld [vmem:[%s1 + $0x48] sm:$0xff]
    %v33 = vld [vmem:[%s1 + $0x50] sm:$0xff]
    %v34 = vld [vmem:[%s1 + $0x58] sm:$0xff]
    %v35 = vld [vmem:[%s1 + $0x60] sm:$0xff]
    %v36 = vld [vmem:[%s1 + $0x68] sm:$0xff]
    %v37 = vld [vmem:[%s1 + $0x70] sm:$0xff]
    %v38 = vld [vmem:[%s1 + $0x78] sm:$0xff]
    %v39 = vld [vmem:[%s1 + $0x80] sm:$0xff]
    %v40 = vld [vmem:[%s1 + $0x88] sm:$0xff]
    %v41 = vld [vmem:[%s1 + $0x90] sm:$0xff]
    %v42 = vld [vmem:[%s1 + $0x98] sm:$0xff]
    %v43 = vld [vmem:[%s1 + $0xa0] sm:$0xff]
    %v44 = vld [vmem:[%s1 + $0xa8] sm:$0xff]
    %v45 = vld [vmem:[%s1 + $0xb0] sm:$0xff]
    %v46 = vld [vmem:[%s1 + $0xb8] sm:$0xff]
    %v47 = vld [vmem:[%s1 + $0xc0] sm:$0xff]
    %v48 = vld [vmem:[%s1 + $0xc8] sm:$0xff]
    %v49 = vld [vmem:[%s1 + $0xd0] sm:$0xff]
    %v50 = vld [vmem:[%s1 + $0xd8] sm:$0xff]
    %v51 = vld [vmem:[%s1 + $0xe0] sm:$0xff]
    %v52 = vld [vmem:[%s1 + $0xe8] sm:$0xff]
    %v53 = vld [vmem:[%s1 + $0xf0] sm:$0xff]
    %v54 = vld [vmem:[%s1 + $0xf8] sm:$0xff]
    %v55 = vld [vmem:[%s2] sm:$0xf]
    %v57 = vlaneseq
    %v58 = vshrl.u32 %v57, 7
    %v59 = vsub.s32 0, %v58
    %v60 = vrot.slane %v55, %v59
    %v61 = vlaneseq
    %v62 = vshrl.u32 %v61, 7
    %v63 = vsub.s32 1, %v62
    %v64 = vrot.slane %v55, %v63
    %v65 = vlaneseq
    %v66 = vshrl.u32 %v65, 7
    %v67 = vsub.s32 2, %v66
    %v68 = vrot.slane %v55, %v67
    %v69 = vlaneseq
    %v70 = vshrl.u32 %v69, 7
    %v71 = vsub.s32 3, %v70
    %v72 = vrot.slane %v55, %v71
    %v109 = vunpack.c.l.b16 %v23
    %v110 = vunpack.c.h.b16 %v23
    %v111 = vunpack.c.l.b16 %v24
    %v112 = vunpack.c.h.b16 %v24
    %v113 = vunpack.c.l.b16 %v25
    %v114 = vunpack.c.h.b16 %v25
    %v115 = vunpack.c.l.b16 %v26
    %v116 = vunpack.c.h.b16 %v26
    %v117 = vunpack.c.l.b16 %v27
    %v118 = vunpack.c.h.b16 %v27
    %v119 = vunpack.c.l.b16 %v28
    %v120 = vunpack.c.h.b16 %v28
    %v121 = vunpack.c.l.b16 %v29
    %v122 = vunpack.c.h.b16 %v29
    %v123 = vunpack.c.l.b16 %v30
    %v124 = vunpack.c.h.b16 %v30
    %v125 = vunpack.c.l.b16 %v31
    %v126 = vunpack.c.h.b16 %v31
    %v127 = vunpack.c.l.b16 %v32
    %v128 = vunpack.c.h.b16 %v32
    %v129 = vunpack.c.l.b16 %v33
    %v130 = vunpack.c.h.b16 %v33
    %v131 = vunpack.c.l.b16 %v34
    %v132 = vunpack.c.h.b16 %v34
    %v133 = vunpack.c.l.b16 %v35
    %v134 = vunpack.c.h.b16 %v35
    %v135 = vunpack.c.l.b16 %v36
    %v136 = vunpack.c.h.b16 %v36
    %v137 = vunpack.c.l.b16 %v37
    %v138 = vunpack.c.h.b16 %v37
    %v139 = vunpack.c.l.b16 %v38
    %v140 = vunpack.c.h.b16 %v38
    %v141 = vunpack.c.l.b16 %v39
    %v142 = vunpack.c.h.b16 %v39
    %v143 = vunpack.c.l.b16 %v40
    %v144 = vunpack.c.h.b16 %v40
    %v145 = vunpack.c.l.b16 %v41
    %v146 = vunpack.c.h.b16 %v41
    %v147 = vunpack.c.l.b16 %v42
    %v148 = vunpack.c.h.b16 %v42
    %v149 = vunpack.c.l.b16 %v43
    %v150 = vunpack.c.h.b16 %v43
    %v151 = vunpack.c.l.b16 %v44
    %v152 = vunpack.c.h.b16 %v44
    %v153 = vunpack.c.l.b16 %v45
    %v154 = vunpack.c.h.b16 %v45
    %v155 = vunpack.c.l.b16 %v46
    %v156 = vunpack.c.h.b16 %v46
    %v157 = vunpack.c.l.b16 %v47
    %v158 = vunpack.c.h.b16 %v47
    %v159 = vunpack.c.l.b16 %v48
    %v160 = vunpack.c.h.b16 %v48
    %v161 = vunpack.c.l.b16 %v49
    %v162 = vunpack.c.h.b16 %v49
    %v163 = vunpack.c.l.b16 %v50
    %v164 = vunpack.c.h.b16 %v50
    %v165 = vunpack.c.l.b16 %v51
    %v166 = vunpack.c.h.b16 %v51
    %v167 = vunpack.c.l.b16 %v52
    %v168 = vunpack.c.h.b16 %v52
    %v169 = vunpack.c.l.b16 %v53
    %v170 = vunpack.c.h.b16 %v53
    %v171 = vunpack.c.l.b16 %v54
    %v172 = vunpack.c.h.b16 %v54
    %v173 = vpack.c.b16 %v113, %v109
    %v174 = vpack.c.b16 %v114, %v110
    %v175 = vpack.c.b16 %v115, %v111
    %v176 = vpack.c.b16 %v116, %v112
    %v177 = vpack.c.b16 %v121, %v117
    %v178 = vpack.c.b16 %v122, %v118
    %v179 = vpack.c.b16 %v123, %v119
    %v180 = vpack.c.b16 %v124, %v120
    %v181 = vpack.c.b16 %v129, %v125
    %v182 = vpack.c.b16 %v130, %v126
    %v183 = vpack.c.b16 %v131, %v127
    %v184 = vpack.c.b16 %v132, %v128
    %v185 = vpack.c.b16 %v137, %v133
    %v186 = vpack.c.b16 %v138, %v134
    %v187 = vpack.c.b16 %v139, %v135
    %v188 = vpack.c.b16 %v140, %v136
    %v189 = vpack.c.b16 %v145, %v141
    %v190 = vpack.c.b16 %v146, %v142
    %v191 = vpack.c.b16 %v147, %v143
    %v192 = vpack.c.b16 %v148, %v144
    %v193 = vpack.c.b16 %v153, %v149
    %v194 = vpack.c.b16 %v154, %v150
    %v195 = vpack.c.b16 %v155, %v151
    %v196 = vpack.c.b16 %v156, %v152
    %v197 = vpack.c.b16 %v161, %v157
    %v198 = vpack.c.b16 %v162, %v158
    %v199 = vpack.c.b16 %v163, %v159
    %v200 = vpack.c.b16 %v164, %v160
    %v201 = vpack.c.b16 %v169, %v165
    %v202 = vpack.c.b16 %v170, %v166
    %v203 = vpack.c.b16 %v171, %v167
    %v204 = vpack.c.b16 %v172, %v168
    %237 = vmatprep.subr.bf16.mxu0 %v202
    %238 = vmatpush1.bf16.msra.mxu0 %v201
    %239 = vmatprep.subr.bf16.mxu0 %v198
    %240 = vmatpush1.bf16.msra.mxu0 %v197
    %241 = vmatprep.subr.bf16.mxu0 %v194
    %242 = vmatpush1.bf16.msra.mxu0 %v193
    %243 = vmatprep.subr.bf16.mxu0 %v190
    %244 = vmatpush1.bf16.msra.mxu0 %v189
    %245 = vmatprep.subr.bf16.mxu0 %v186
    %246 = vmatpush1.bf16.msra.mxu0 %v185
    %247 = vmatprep.subr.bf16.mxu0 %v182
    %248 = vmatpush1.bf16.msra.mxu0 %v181
    %249 = vmatprep.subr.bf16.mxu0 %v178
    %250 = vmatpush1.bf16.msra.mxu0 %v177
    %251 = vmatprep.subr.bf16.mxu0 %v174
    %252 = vmatpush1.bf16.msra.mxu0 %v173
    %253 = vmatprep.subr.bf16.mxu0 0
    %254 = vmatpush2.bf16.msra.mxu0 0
    %255 = vmatprep.subr.bf16.mxu0 0
    %256 = vmatpush2.bf16.msra.mxu0 0
    %257 = vmatprep.subr.bf16.mxu0 0
    %258 = vmatpush2.bf16.msra.mxu0 0
    %259 = vmatprep.subr.bf16.mxu0 0
    %260 = vmatpush2.bf16.msra.mxu0 0
    %261 = vmatprep.subr.bf16.mxu0 0
    %262 = vmatpush2.bf16.msra.mxu0 0
    %263 = vmatprep.subr.bf16.mxu0 0
    %264 = vmatpush2.bf16.msra.mxu0 0
    %265 = vmatprep.subr.bf16.mxu0 0
    %266 = vmatpush2.bf16.msra.mxu0 0
    %267 = vmatprep.subr.bf16.mxu0 0
    %268 = vmatpush2.bf16.msra.mxu0 0
    %269 = vmatprep.mubr.bf16.mxu0 0
    %270 = vmatmul.mubr.bf16.gmra.mxu0 %v22
    %v271 = vpop.f32.mrf.mxu0
    %v272 = vadd.f32 %v60, %v271
    %v273 = vpop.f32.mrf.mxu0
    %v274 = vadd.f32 %v64, %v273
    %v275 = vpop.f32.mrf.mxu0
    %v276 = vpop.f32.mrf.mxu0
    %277 = vdwg.mxu0
    %278 = vmatprep.subr.bf16.mxu0 %v204
    %279 = vmatpush1.bf16.msra.mxu0 %v203
    %280 = vmatprep.subr.bf16.mxu0 %v200
    %281 = vmatpush1.bf16.msra.mxu0 %v199
    %282 = vmatprep.subr.bf16.mxu0 %v196
    %283 = vmatpush1.bf16.msra.mxu0 %v195
    %284 = vmatprep.subr.bf16.mxu0 %v192
    %285 = vmatpush1.bf16.msra.mxu0 %v191
    %286 = vmatprep.subr.bf16.mxu0 %v188
    %287 = vmatpush1.bf16.msra.mxu0 %v187
    %288 = vmatprep.subr.bf16.mxu0 %v184
    %289 = vmatpush1.bf16.msra.mxu0 %v183
    %290 = vmatprep.subr.bf16.mxu0 %v180
    %291 = vmatpush1.bf16.msra.mxu0 %v179
    %292 = vmatprep.subr.bf16.mxu0 %v176
    %293 = vmatpush1.bf16.msra.mxu0 %v175
    %294 = vmatprep.subr.bf16.mxu0 0
    %295 = vmatpush2.bf16.msra.mxu0 0
    %296 = vmatprep.subr.bf16.mxu0 0
    %297 = vmatpush2.bf16.msra.mxu0 0
    %298 = vmatprep.subr.bf16.mxu0 0
    %299 = vmatpush2.bf16.msra.mxu0 0
    %300 = vmatprep.subr.bf16.mxu0 0
    %301 = vmatpush2.bf16.msra.mxu0 0
    %302 = vmatprep.subr.bf16.mxu0 0
    %303 = vmatpush2.bf16.msra.mxu0 0
    %304 = vmatprep.subr.bf16.mxu0 0
    %305 = vmatpush2.bf16.msra.mxu0 0
    %306 = vmatprep.subr.bf16.mxu0 0
    %307 = vmatpush2.bf16.msra.mxu0 0
    %308 = vmatprep.subr.bf16.mxu0 0
    %309 = vmatpush2.bf16.msra.mxu0 0
    %310 = vmatprep.mubr.bf16.mxu0 0
    %311 = vmatmul.mubr.bf16.gmra.mxu0 %v22
    %v312 = vpop.f32.mrf.mxu0
    %v313 = vadd.f32 %v68, %v312
    %v314 = vpop.f32.mrf.mxu0
    %v315 = vadd.f32 %v72, %v314
    %v316 = vpop.f32.mrf.mxu0
    %v317 = vpop.f32.mrf.mxu0
    %318 = vdwg.mxu0
    %v319 = vmax.f32 %v272, 0.0
    %v320 = vmax.f32 %v274, 0.0
    %v321 = vmax.f32 %v313, 0.0
    %v322 = vmax.f32 %v315, 0.0
    %v323 = vpack.c.bf16 %v319, %v319
    %v324 = vpack.c.bf16 %v320, %v320
    %v325 = vpack.c.bf16 %v321, %v321
    %v326 = vpack.c.bf16 %v322, %v322
    %v327 = vld [vmem:[%s3] sm:$0xf]
    %v328 = vld [vmem:[%s3 + $0x4] sm:$0xf]
    %v329 = vld [vmem:[%s3 + $0x8] sm:$0xf]
    %v330 = vld [vmem:[%s3 + $0xc] sm:$0xf]
    %v331 = vld [vmem:[%s3 + $0x10] sm:$0xf]
    %v332 = vld [vmem:[%s3 + $0x14] sm:$0xf]
    %v333 = vld [vmem:[%s3 + $0x18] sm:$0xf]
    %v334 = vld [vmem:[%s3 + $0x1c] sm:$0xf]
    %v335 = vld [vmem:[%s3 + $0x20] sm:$0xf]
    %v336 = vld [vmem:[%s3 + $0x24] sm:$0xf]
    %v337 = vld [vmem:[%s3 + $0x28] sm:$0xf]
    %v338 = vld [vmem:[%s3 + $0x2c] sm:$0xf]
    %v339 = vld [vmem:[%s3 + $0x30] sm:$0xf]
    %v340 = vld [vmem:[%s3 + $0x34] sm:$0xf]
    %v341 = vld [vmem:[%s3 + $0x38] sm:$0xf]
    %v342 = vld [vmem:[%s3 + $0x3c] sm:$0xf]
    %v343 = vld [vmem:[%s3 + $0x40] sm:$0xf]
    %v344 = vld [vmem:[%s3 + $0x44] sm:$0xf]
    %v345 = vld [vmem:[%s3 + $0x48] sm:$0xf]
    %v346 = vld [vmem:[%s3 + $0x4c] sm:$0xf]
    %v347 = vld [vmem:[%s3 + $0x50] sm:$0xf]
    %v348 = vld [vmem:[%s3 + $0x54] sm:$0xf]
    %v349 = vld [vmem:[%s3 + $0x58] sm:$0xf]
    %v350 = vld [vmem:[%s3 + $0x5c] sm:$0xf]
    %v351 = vld [vmem:[%s3 + $0x60] sm:$0xf]
    %v352 = vld [vmem:[%s3 + $0x64] sm:$0xf]
    %v353 = vld [vmem:[%s3 + $0x68] sm:$0xf]
    %v354 = vld [vmem:[%s3 + $0x6c] sm:$0xf]
    %v355 = vld [vmem:[%s3 + $0x70] sm:$0xf]
    %v356 = vld [vmem:[%s3 + $0x74] sm:$0xf]
    %v357 = vld [vmem:[%s3 + $0x78] sm:$0xf]
    %v358 = vld [vmem:[%s3 + $0x7c] sm:$0xf]
    %v359 = vld [vmem:[%s3 + $0x80] sm:$0xf]
    %v360 = vld [vmem:[%s3 + $0x84] sm:$0xf]
    %v361 = vld [vmem:[%s3 + $0x88] sm:$0xf]
    %v362 = vld [vmem:[%s3 + $0x8c] sm:$0xf]
    %v363 = vld [vmem:[%s3 + $0x90] sm:$0xf]
    %v364 = vld [vmem:[%s3 + $0x94] sm:$0xf]
    %v365 = vld [vmem:[%s3 + $0x98] sm:$0xf]
    %v366 = vld [vmem:[%s3 + $0x9c] sm:$0xf]
    %v367 = vld [vmem:[%s3 + $0xa0] sm:$0xf]
    %v368 = vld [vmem:[%s3 + $0xa4] sm:$0xf]
    %v369 = vld [vmem:[%s3 + $0xa8] sm:$0xf]
    %v370 = vld [vmem:[%s3 + $0xac] sm:$0xf]
    %v371 = vld [vmem:[%s3 + $0xb0] sm:$0xf]
    %v372 = vld [vmem:[%s3 + $0xb4] sm:$0xf]
    %v373 = vld [vmem:[%s3 + $0xb8] sm:$0xf]
    %v374 = vld [vmem:[%s3 + $0xbc] sm:$0xf]
    %v375 = vld [vmem:[%s3 + $0xc0] sm:$0xf]
    %v376 = vld [vmem:[%s3 + $0xc4] sm:$0xf]
    %v377 = vld [vmem:[%s3 + $0xc8] sm:$0xf]
    %v378 = vld [vmem:[%s3 + $0xcc] sm:$0xf]
    %v379 = vld [vmem:[%s3 + $0xd0] sm:$0xf]
    %v380 = vld [vmem:[%s3 + $0xd4] sm:$0xf]
    %v381 = vld [vmem:[%s3 + $0xd8] sm:$0xf]
    %v382 = vld [vmem:[%s3 + $0xdc] sm:$0xf]
    %v383 = vld [vmem:[%s3 + $0xe0] sm:$0xf]
    %v384 = vld [vmem:[%s3 + $0xe4] sm:$0xf]
    %v385 = vld [vmem:[%s3 + $0xe8] sm:$0xf]
    %v386 = vld [vmem:[%s3 + $0xec] sm:$0xf]
    %v387 = vld [vmem:[%s3 + $0xf0] sm:$0xf]
    %v388 = vld [vmem:[%s3 + $0xf4] sm:$0xf]
    %v389 = vld [vmem:[%s3 + $0xf8] sm:$0xf]
    %v390 = vld [vmem:[%s3 + $0xfc] sm:$0xf]
    %v391 = vld [vmem:[%s4] sm:$0x1]
    %v393 = vlaneseq
    %v394 = vshrl.u32 %v393, 7
    %v395 = vsub.s32 0, %v394
    %v396 = vrot.slane %v391, %v395
    %v462 = vunpack.c.l.b16 %v327
    %v463 = vunpack.c.l.b16 %v328
    %v464 = vunpack.c.l.b16 %v329
    %v465 = vunpack.c.l.b16 %v330
    %v466 = vunpack.c.l.b16 %v331
    %v467 = vunpack.c.l.b16 %v332
    %v468 = vunpack.c.l.b16 %v333
    %v469 = vunpack.c.l.b16 %v334
    %v470 = vunpack.c.l.b16 %v335
    %v471 = vunpack.c.l.b16 %v336
    %v472 = vunpack.c.l.b16 %v337
    %v473 = vunpack.c.l.b16 %v338
    %v474 = vunpack.c.l.b16 %v339
    %v475 = vunpack.c.l.b16 %v340
    %v476 = vunpack.c.l.b16 %v341
    %v477 = vunpack.c.l.b16 %v342
    %v478 = vunpack.c.l.b16 %v343
    %v479 = vunpack.c.l.b16 %v344
    %v480 = vunpack.c.l.b16 %v345
    %v481 = vunpack.c.l.b16 %v346
    %v482 = vunpack.c.l.b16 %v347
    %v483 = vunpack.c.l.b16 %v348
    %v484 = vunpack.c.l.b16 %v349
    %v485 = vunpack.c.l.b16 %v350
    %v486 = vunpack.c.l.b16 %v351
    %v487 = vunpack.c.l.b16 %v352
    %v488 = vunpack.c.l.b16 %v353
    %v489 = vunpack.c.l.b16 %v354
    %v490 = vunpack.c.l.b16 %v355
    %v491 = vunpack.c.l.b16 %v356
    %v492 = vunpack.c.l.b16 %v357
    %v493 = vunpack.c.l.b16 %v358
    %v494 = vunpack.c.l.b16 %v359
    %v495 = vunpack.c.l.b16 %v360
    %v496 = vunpack.c.l.b16 %v361
    %v497 = vunpack.c.l.b16 %v362
    %v498 = vunpack.c.l.b16 %v363
    %v499 = vunpack.c.l.b16 %v364
    %v500 = vunpack.c.l.b16 %v365
    %v501 = vunpack.c.l.b16 %v366
    %v502 = vunpack.c.l.b16 %v367
    %v503 = vunpack.c.l.b16 %v368
    %v504 = vunpack.c.l.b16 %v369
    %v505 = vunpack.c.l.b16 %v370
    %v506 = vunpack.c.l.b16 %v371
    %v507 = vunpack.c.l.b16 %v372
    %v508 = vunpack.c.l.b16 %v373
    %v509 = vunpack.c.l.b16 %v374
    %v510 = vunpack.c.l.b16 %v375
    %v511 = vunpack.c.l.b16 %v376
    %v512 = vunpack.c.l.b16 %v377
    %v513 = vunpack.c.l.b16 %v378
    %v514 = vunpack.c.l.b16 %v379
    %v515 = vunpack.c.l.b16 %v380
    %v516 = vunpack.c.l.b16 %v381
    %v517 = vunpack.c.l.b16 %v382
    %v518 = vunpack.c.l.b16 %v383
    %v519 = vunpack.c.l.b16 %v384
    %v520 = vunpack.c.l.b16 %v385
    %v521 = vunpack.c.l.b16 %v386
    %v522 = vunpack.c.l.b16 %v387
    %v523 = vunpack.c.l.b16 %v388
    %v524 = vunpack.c.l.b16 %v389
    %v525 = vunpack.c.l.b16 %v390
    %v526 = vpack.c.b16 %v463, %v462
    %v527 = vpack.c.b16 %v465, %v464
    %v528 = vpack.c.b16 %v467, %v466
    %v529 = vpack.c.b16 %v469, %v468
    %v530 = vpack.c.b16 %v471, %v470
    %v531 = vpack.c.b16 %v473, %v472
    %v532 = vpack.c.b16 %v475, %v474
    %v533 = vpack.c.b16 %v477, %v476
    %v534 = vpack.c.b16 %v479, %v478
    %v535 = vpack.c.b16 %v481, %v480
    %v536 = vpack.c.b16 %v483, %v482
    %v537 = vpack.c.b16 %v485, %v484
    %v538 = vpack.c.b16 %v487, %v486
    %v539 = vpack.c.b16 %v489, %v488
    %v540 = vpack.c.b16 %v491, %v490
    %v541 = vpack.c.b16 %v493, %v492
    %v542 = vpack.c.b16 %v495, %v494
    %v543 = vpack.c.b16 %v497, %v496
    %v544 = vpack.c.b16 %v499, %v498
    %v545 = vpack.c.b16 %v501, %v500
    %v546 = vpack.c.b16 %v503, %v502
    %v547 = vpack.c.b16 %v505, %v504
    %v548 = vpack.c.b16 %v507, %v506
    %v549 = vpack.c.b16 %v509, %v508
    %v550 = vpack.c.b16 %v511, %v510
    %v551 = vpack.c.b16 %v513, %v512
    %v552 = vpack.c.b16 %v515, %v514
    %v553 = vpack.c.b16 %v517, %v516
    %v554 = vpack.c.b16 %v519, %v518
    %v555 = vpack.c.b16 %v521, %v520
    %v556 = vpack.c.b16 %v523, %v522
    %v557 = vpack.c.b16 %v525, %v524
    %590 = vmatprep.subr.bf16.mxu0 0
    %591 = vmatpush1.bf16.msra.mxu0 %v533
    %592 = vmatprep.subr.bf16.mxu0 0
    %593 = vmatpush1.bf16.msra.mxu0 %v532
    %594 = vmatprep.subr.bf16.mxu0 0
    %595 = vmatpush1.bf16.msra.mxu0 %v531
    %596 = vmatprep.subr.bf16.mxu0 0
    %597 = vmatpush1.bf16.msra.mxu0 %v530
    %598 = vmatprep.subr.bf16.mxu0 0
    %599 = vmatpush1.bf16.msra.mxu0 %v529
    %600 = vmatprep.subr.bf16.mxu0 0
    %601 = vmatpush1.bf16.msra.mxu0 %v528
    %602 = vmatprep.subr.bf16.mxu0 0
    %603 = vmatpush1.bf16.msra.mxu0 %v527
    %604 = vmatprep.subr.bf16.mxu0 0
    %605 = vmatpush1.bf16.msra.mxu0 %v526
    %606 = vmatprep.subr.bf16.mxu0 0
    %607 = vmatpush2.bf16.msra.mxu0 %v541
    %608 = vmatprep.subr.bf16.mxu0 0
    %609 = vmatpush2.bf16.msra.mxu0 %v540
    %610 = vmatprep.subr.bf16.mxu0 0
    %611 = vmatpush2.bf16.msra.mxu0 %v539
    %612 = vmatprep.subr.bf16.mxu0 0
    %613 = vmatpush2.bf16.msra.mxu0 %v538
    %614 = vmatprep.subr.bf16.mxu0 0
    %615 = vmatpush2.bf16.msra.mxu0 %v537
    %616 = vmatprep.subr.bf16.mxu0 0
    %617 = vmatpush2.bf16.msra.mxu0 %v536
    %618 = vmatprep.subr.bf16.mxu0 0
    %619 = vmatpush2.bf16.msra.mxu0 %v535
    %620 = vmatprep.subr.bf16.mxu0 0
    %621 = vmatpush2.bf16.msra.mxu0 %v534
    %622 = vmatprep.mubr.bf16.mxu0 %v324
    %623 = vmatmul.mubr.bf16.gmra.mxu0 %v323
    %v624 = vpop.f32.mrf.mxu0
    %v625 = vadd.f32 %v396, %v624
    %v626 = vpop.f32.mrf.mxu0
    %v627 = vpop.f32.mrf.mxu0
    %v628 = vpop.f32.mrf.mxu0
    %629 = vdwg.mxu0
    %630 = vmatprep.subr.bf16.mxu0 0
    %631 = vmatpush1.bf16.msra.mxu0 %v549
    %632 = vmatprep.subr.bf16.mxu0 0
    %633 = vmatpush1.bf16.msra.mxu0 %v548
    %634 = vmatprep.subr.bf16.mxu0 0
    %635 = vmatpush1.bf16.msra.mxu0 %v547
    %636 = vmatprep.subr.bf16.mxu0 0
    %637 = vmatpush1.bf16.msra.mxu0 %v546
    %638 = vmatprep.subr.bf16.mxu0 0
    %639 = vmatpush1.bf16.msra.mxu0 %v545
    %640 = vmatprep.subr.bf16.mxu0 0
    %641 = vmatpush1.bf16.msra.mxu0 %v544
    %642 = vmatprep.subr.bf16.mxu0 0
    %643 = vmatpush1.bf16.msra.mxu0 %v543
    %644 = vmatprep.subr.bf16.mxu0 0
    %645 = vmatpush1.bf16.msra.mxu0 %v542
    %646 = vmatprep.subr.bf16.mxu0 0
    %647 = vmatpush2.bf16.msra.mxu0 %v557
    %648 = vmatprep.subr.bf16.mxu0 0
    %649 = vmatpush2.bf16.msra.mxu0 %v556
    %650 = vmatprep.subr.bf16.mxu0 0
    %651 = vmatpush2.bf16.msra.mxu0 %v555
    %652 = vmatprep.subr.bf16.mxu0 0
    %653 = vmatpush2.bf16.msra.mxu0 %v554
    %654 = vmatprep.subr.bf16.mxu0 0
    %655 = vmatpush2.bf16.msra.mxu0 %v553
    %656 = vmatprep.subr.bf16.mxu0 0
    %657 = vmatpush2.bf16.msra.mxu0 %v552
    %658 = vmatprep.subr.bf16.mxu0 0
    %659 = vmatpush2.bf16.msra.mxu0 %v551
    %660 = vmatprep.subr.bf16.mxu0 0
    %661 = vmatpush2.bf16.msra.mxu0 %v550
    %662 = vmatprep.mubr.bf16.mxu0 %v326
    %663 = vmatmul.mubr.bf16.gmra.mxu0 %v325
    %v664 = vpop.f32.mrf.mxu0
    %v665 = vadd.f32 %v625, %v664
    %v666 = vpop.f32.mrf.mxu0
    %v667 = vpop.f32.mrf.mxu0
    %v668 = vpop.f32.mrf.mxu0
    %669 = vdwg.mxu0
    %670 = vst [vmem:[#allocation2] sm:$0x3] %v665
    // Predicated region
    $region22: #{cnn_dqn_forward.7} parent=1 // pred_check
      _
    $region23: #{cnn_dqn_forward.7} parent=1 // pred_check_branch
      %672 = sbr.rel (0) target = $region25
    $region24: #{cnn_dqn_forward.7} parent=1 // pred_region
      %s674 = ssub.s32 32, 32
      %675 = vsyncadd [#allocation3], %s674
      %s677 = sshll.u32 [#allocation2], 4
      %s678 = int_to_ptr.vmem [resolvable:$true] %s677
      %680 = dma.vmem_to_hbm [thread:$0]  %s678, 32, %s5, [#allocation3]
    $region25: #{cnn_dqn_forward.7} parent=1 // pred_fallthru
      _
    // Predicated region
    $region26: #{cnn_dqn_forward.7} parent=1 // pred_check
      _
    $region27: #{cnn_dqn_forward.7} parent=1 // pred_check_branch
      %682 = sbr.rel (0) target = $region29
    $region28: #{cnn_dqn_forward.7} parent=1 // pred_region
      %683 = dma.done [#allocation3], 32
    $region29: #{cnn_dqn_forward.7} parent=1 // pred_fallthru
      _
    %684 = vsyncpa [#allocation3], 1

</llo_original>
